<compile_context>
chip_gen: v6e
topology: v6e:2x2x1
jax: 0.10.0
libtpu: 0.0.40
codegen_flags: <defaults>
</compile_context>

<pallas_src>
import math

import jax
import jax.numpy as jnp
from jax.experimental import pallas as pl
from jax.experimental.pallas import tpu as pltpu


# ----------------------------------------------------------------------------
# Kernel bodies
# ----------------------------------------------------------------------------
def _lstm_cell(gates, c_prev, H):
    """One LSTM cell update. PyTorch gate order [i, f, g, o]; f32 math."""
    i_g = jax.nn.sigmoid(gates[:, 0 * H:1 * H])
    f_g = jax.nn.sigmoid(gates[:, 1 * H:2 * H])
    g_g = jnp.tanh(gates[:, 2 * H:3 * H])
    o_g = jax.nn.sigmoid(gates[:, 3 * H:4 * H])
    c_new = f_g * c_prev + i_g * g_g
    h_new = o_g * jnp.tanh(c_new)
    return h_new, c_new


def _bilstm_body(x2d_ref, wih_f_ref, whh_f_ref, b_f_ref,
                 wih_b_ref, whh_b_ref, b_b_ref,
                 out_ref, gxf_sc, gxb_sc):
    """Fused bidirectional LSTM layer over the whole sequence.

    x2d_ref : (T*B, D_in)  time-major input flattened over (T, B)
    w*_ref  : (D_in, 4H) / (H, 4H) weights (pre-transposed), b*_ref: (1, 4H)
    out_ref : (T, B, 2H)   fw half in [..., :H], bw half in [..., H:]
    gx*_sc  : (T*B, 4H)    VMEM scratch holding the hoisted input projection
    """
    T = out_ref.shape[0]
    B = out_ref.shape[1]
    H = whh_f_ref.shape[0]

    # ---- hoisted input projection: one big matmul per direction (MXU-friendly
    # M = T*B instead of T tiny M = B matmuls inside the recurrence).
    x2d = x2d_ref[...]
    gxf_sc[...] = (jnp.dot(x2d, wih_f_ref[...],
                           preferred_element_type=jnp.float32) + b_f_ref[...])
    gxb_sc[...] = (jnp.dot(x2d, wih_b_ref[...],
                           preferred_element_type=jnp.float32) + b_b_ref[...])

    whh_f = whh_f_ref[...]
    whh_b = whh_b_ref[...]

    h_f = jnp.zeros((B, H), jnp.float32)
    c_f = jnp.zeros((B, H), jnp.float32)
    h_b = jnp.zeros((B, H), jnp.float32)
    c_b = jnp.zeros((B, H), jnp.float32)

    # ---- recurrence: fully unrolled (T is the small spatial width W), all
    # indices static.  Only h @ W_hh + gate elementwise per step per direction.
    # TODO(synk): for long sequences, chunk T via a grid axis instead of full unroll.
    for t in range(T):
        # forward direction, time step t
        gates_f = gxf_sc[t * B:(t + 1) * B, :] + jnp.dot(
            h_f, whh_f, preferred_element_type=jnp.float32)
        h_f, c_f = _lstm_cell(gates_f, c_f, H)
        out_ref[t, :, 0:H] = h_f.astype(out_ref.dtype)

        # backward direction, time step T-1-t (reversal via indexing; no
        # HBM reverse copies and no wrapper concat).
        tr = T - 1 - t
        gates_b = gxb_sc[tr * B:(tr + 1) * B, :] + jnp.dot(
            h_b, whh_b, preferred_element_type=jnp.float32)
        h_b, c_b = _lstm_cell(gates_b, c_b, H)
        out_ref[tr, :, H:2 * H] = h_b.astype(out_ref.dtype)


def _bilstm_layer_kernel(x2d_ref, wih_f_ref, whh_f_ref, b_f_ref,
                         wih_b_ref, whh_b_ref, b_b_ref,
                         out_ref, gxf_sc, gxb_sc):
    _bilstm_body(x2d_ref, wih_f_ref, whh_f_ref, b_f_ref,
                 wih_b_ref, whh_b_ref, b_b_ref, out_ref, gxf_sc, gxb_sc)


def _bilstm_layer_cls_kernel(x2d_ref, wih_f_ref, whh_f_ref, b_f_ref,
                             wih_b_ref, whh_b_ref, b_b_ref,
                             cls_w_ref, cls_b_ref,
                             out_ref, logits_ref, gxf_sc, gxb_sc):
    """Last layer: same as above + fused Linear classifier on out[T-1]."""
    _bilstm_body(x2d_ref, wih_f_ref, whh_f_ref, b_f_ref,
                 wih_b_ref, whh_b_ref, b_b_ref, out_ref, gxf_sc, gxb_sc)
    T = out_ref.shape[0]
    # lstm_out_b_[:, -1, :] == out[T-1]: fw half written at t = T-1, bw half at
    # the backward direction's first processed step.  Read back from VMEM.
    last = out_ref[T - 1]                      # (B, 2H)
    logits_ref[...] = (jnp.dot(last, cls_w_ref[...],
                               preferred_element_type=jnp.float32)
                       + cls_b_ref[...]).astype(logits_ref.dtype)


# ----------------------------------------------------------------------------
# pallas_call wrapper: one call per bidirectional layer
# ----------------------------------------------------------------------------
def bilstm_layer(x_tbd, fw_params, bw_params, classifier=None):
    """One fused bidirectional LSTM layer.

    x_tbd : (T, B, D_in) time-major input
    fw_params / bw_params : (w_ih (D_in,4H), w_hh (H,4H), b (1,4H))
    classifier : optional (cls_w (2H,C), cls_b (1,C)) fused into this call
    returns out (T, B, 2H)  [and logits (B, C) if classifier is given]
    """
    T, B, D_in = x_tbd.shape
    wih_f, whh_f, b_f = fw_params
    wih_b, whh_b, b_b = bw_params
    H = whh_f.shape[0]
    H4 = 4 * H

    # Contiguous reshape (no data movement): kernel consumes the flat (T*B, D)
    # slab for the hoisted input projection.
    x2d = x_tbd.reshape(T * B, D_in)

    def full(shape):
        n = len(shape)
        return pl.BlockSpec(shape, lambda i, _n=n: (0,) * _n)

    in_specs = [
        full((T * B, D_in)),
        full((D_in, H4)), full((H, H4)), full((1, H4)),   # forward dir
        full((D_in, H4)), full((H, H4)), full((1, H4)),   # backward dir
    ]
    scratch_shapes = [
        pltpu.VMEM((T * B, H4), jnp.float32),   # gates_x, forward
        pltpu.VMEM((T * B, H4), jnp.float32),   # gates_x, backward
    ]
    operands = (x2d, wih_f, whh_f, b_f, wih_b, whh_b, b_b)

    if classifier is None:
        kernel = _bilstm_layer_kernel
        out_shape = jax.ShapeDtypeStruct((T, B, 2 * H), jnp.float32)
        out_specs = full((T, B, 2 * H))
    else:
        cls_w, cls_b = classifier
        C = cls_w.shape[1]
        kernel = _bilstm_layer_cls_kernel
        in_specs = in_specs + [full((2 * H, C)), full((1, C))]
        operands = operands + (cls_w, cls_b)
        out_shape = (jax.ShapeDtypeStruct((T, B, 2 * H), jnp.float32),
                     jax.ShapeDtypeStruct((B, C), jnp.float32))
        out_specs = (full((T, B, 2 * H)), full((B, C)))

    return pl.pallas_call(
        kernel,
        out_shape=out_shape,
        grid_spec=pltpu.PrefetchScalarGridSpec(
            num_scalar_prefetch=0,
            grid=(1,),                      # time loop lives inside the kernel
            in_specs=in_specs,
            out_specs=out_specs,
            scratch_shapes=scratch_shapes,
        ),
        compiler_params=pltpu.CompilerParams(
            dimension_semantics=("arbitrary",)),
    )(*operands)


# ----------------------------------------------------------------------------
# Parameters (deterministic init, PyTorch-style uniform(-1/sqrt(H), 1/sqrt(H)))
# ----------------------------------------------------------------------------
def init_params(key, dim_fc, hidden_dim, num_layers, num_classes):
    k = 1.0 / math.sqrt(hidden_dim)
    params = {"lstm": []}
    for layer in range(num_layers):
        d_in = dim_fc if layer == 0 else 2 * hidden_dim
        directions = []
        for _ in range(2):  # forward, backward
            key, k1, k2, k3, k4 = jax.random.split(key, 5)
            w_ih = jax.random.uniform(
                k1, (d_in, 4 * hidden_dim), jnp.float32, -k, k)
            w_hh = jax.random.uniform(
                k2, (hidden_dim, 4 * hidden_dim), jnp.float32, -k, k)
            b_ih = jax.random.uniform(k3, (4 * hidden_dim,), jnp.float32, -k, k)
            b_hh = jax.random.uniform(k4, (4 * hidden_dim,), jnp.float32, -k, k)
            b = (b_ih + b_hh).reshape(1, 4 * hidden_dim)
            directions.append((w_ih, w_hh, b))
        params["lstm"].append(tuple(directions))

    kc = 1.0 / math.sqrt(2 * hidden_dim)
    key, k1, k2 = jax.random.split(key, 3)
    params["cls_w"] = jax.random.uniform(
        k1, (2 * hidden_dim, num_classes), jnp.float32, -kc, kc)
    params["cls_b"] = jax.random.uniform(
        k2, (1, num_classes), jnp.float32, -kc, kc)
    return params


# ----------------------------------------------------------------------------
# Forward pass == LSTM3Bi.forward
# ----------------------------------------------------------------------------
def lstm3bi_forward(x0, params):
    """x0: NCHW (B, C, H, W) -> (logits (B, num_classes), [])."""
    B, C, Hs, W = x0.shape
    # x0.view(B, -1, W).permute(0, 2, 1), then straight to time-major (T, B, D).
    h = jnp.transpose(x0.reshape(B, C * Hs, W), (2, 0, 1))   # (T=W, B, C*Hs)

    n_layers = len(params["lstm"])
    logits = None
    for li, (fw_p, bw_p) in enumerate(params["lstm"]):
        if li < n_layers - 1:
            h = bilstm_layer(h, fw_p, bw_p)
        else:
            h, logits = bilstm_layer(
                h, fw_p, bw_p,
                classifier=(params["cls_w"], params["cls_b"]))
    return logits, []                        # action_all_base stays []


# ----------------------------------------------------------------------------
if __name__ == "__main__":
    # Small shapes consistent with the module: dim_fc = C*H, seq len = W.
    B, C, Hs, W = 2, 4, 6, 8        # dim_fc = 24, seq = 8
    HIDDEN = 32
    NUM_LAYERS = 3
    NUM_CLASSES = 10

    key = jax.random.PRNGKey(0)
    key, kx = jax.random.split(key)
    x0 = jax.random.normal(kx, (B, C, Hs, W), dtype=jnp.float32)

    params = init_params(key, dim_fc=C * Hs, hidden_dim=HIDDEN,
                         num_layers=NUM_LAYERS, num_classes=NUM_CLASSES)

    logits, action_all = lstm3bi_forward(x0, params)
    logits = jax.block_until_ready(logits)

    assert logits.shape == (B, NUM_CLASSES)
    assert bool(jnp.all(jnp.isfinite(logits)))
    print("KERNEL_OK")
</pallas_src>

<mosaic_0001>
module attributes {stable_mosaic.version = 11 : i64} {
  func.func @_bilstm_layer_kernel(%arg0: i32, %arg1: memref<16x24xf32, #tpu.memory_space<vmem>>, %arg2: memref<24x128xf32, #tpu.memory_space<vmem>>, %arg3: memref<32x128xf32, #tpu.memory_space<vmem>>, %arg4: memref<1x128xf32, #tpu.memory_space<vmem>>, %arg5: memref<24x128xf32, #tpu.memory_space<vmem>>, %arg6: memref<32x128xf32, #tpu.memory_space<vmem>>, %arg7: memref<1x128xf32, #tpu.memory_space<vmem>>, %arg8: memref<8x2x64xf32, #tpu.memory_space<vmem>>, %arg9: memref<16x128xf32, #tpu.memory_space<vmem>>, %arg10: memref<16x128xf32, #tpu.memory_space<vmem>>) attributes {dimension_semantics = [#tpu.dimension_semantics<arbitrary>], iteration_bounds = array<i64: 1>, scalar_prefetch = 0 : i64, scratch_operands = 2 : i64, tpu.core_type = #tpu.core_type<tc>, window_params = [{pipeline_mode = #tpu.pipeline_mode<synchronous>, transform_indices = @transform_0, window_bounds = array<i64: 16, 24>}, {pipeline_mode = #tpu.pipeline_mode<synchronous>, transform_indices = @transform_1, window_bounds = array<i64: 24, 128>}, {pipeline_mode = #tpu.pipeline_mode<synchronous>, transform_indices = @transform_2, window_bounds = array<i64: 32, 128>}, {pipeline_mode = #tpu.pipeline_mode<synchronous>, transform_indices = @transform_3, window_bounds = array<i64: 1, 128>}, {pipeline_mode = #tpu.pipeline_mode<synchronous>, transform_indices = @transform_4, window_bounds = array<i64: 24, 128>}, {pipeline_mode = #tpu.pipeline_mode<synchronous>, transform_indices = @transform_5, window_bounds = array<i64: 32, 128>}, {pipeline_mode = #tpu.pipeline_mode<synchronous>, transform_indices = @transform_6, window_bounds = array<i64: 1, 128>}, {pipeline_mode = #tpu.pipeline_mode<synchronous>, transform_indices = @transform_7, window_bounds = array<i64: 8, 2, 64>}]} {
    %c0 = arith.constant 0 : index
    %c0_0 = arith.constant 0 : index
    %0 = vector.load %arg1[%c0, %c0_0] : memref<16x24xf32, #tpu.memory_space<vmem>>, vector<16x24xf32>
    %c0_1 = arith.constant 0 : index
    %c0_2 = arith.constant 0 : index
    %1 = vector.load %arg2[%c0_1, %c0_2] : memref<24x128xf32, #tpu.memory_space<vmem>>, vector<24x128xf32>
    %cst = arith.constant dense<0.000000e+00> : vector<16x128xf32>
    %2 = tpu.matmul %0, %1, %cst {dimension_numbers = #tpu.dot_dimension_numbers<[1], [0], [0], [1], [0, 0, 1, 1], [], []>} : vector<16x24xf32>, vector<24x128xf32>, vector<16x128xf32> -> vector<16x128xf32>
    %c0_3 = arith.constant 0 : index
    %c0_4 = arith.constant 0 : index
    %3 = vector.load %arg4[%c0_3, %c0_4] : memref<1x128xf32, #tpu.memory_space<vmem>>, vector<1x128xf32>
    %4 = vector.broadcast %3 : vector<1x128xf32> to vector<16x128xf32>
    %5 = arith.addf %2, %4 : vector<16x128xf32>
    %c0_5 = arith.constant 0 : index
    %c0_6 = arith.constant 0 : index
    %6 = vector.load %arg9[%c0_5, %c0_6] : memref<16x128xf32, #tpu.memory_space<vmem>>, vector<16x128xf32>
    tpu.vector_store %arg9[%c0_5, %c0_6], %5 {strides = array<i32>} : memref<16x128xf32, #tpu.memory_space<vmem>>, vector<16x128xf32>,
    %c0_7 = arith.constant 0 : index
    %c0_8 = arith.constant 0 : index
    %7 = vector.load %arg5[%c0_7, %c0_8] : memref<24x128xf32, #tpu.memory_space<vmem>>, vector<24x128xf32>
    %cst_9 = arith.constant dense<0.000000e+00> : vector<16x128xf32>
    %8 = tpu.matmul %0, %7, %cst_9 {dimension_numbers = #tpu.dot_dimension_numbers<[1], [0], [0], [1], [0, 0, 1, 1], [], []>} : vector<16x24xf32>, vector<24x128xf32>, vector<16x128xf32> -> vector<16x128xf32>
    %c0_10 = arith.constant 0 : index
    %c0_11 = arith.constant 0 : index
    %9 = vector.load %arg7[%c0_10, %c0_11] : memref<1x128xf32, #tpu.memory_space<vmem>>, vector<1x128xf32>
    %10 = vector.broadcast %9 : vector<1x128xf32> to vector<16x128xf32>
    %11 = arith.addf %8, %10 : vector<16x128xf32>
    %c0_12 = arith.constant 0 : index
    %c0_13 = arith.constant 0 : index
    %12 = vector.load %arg10[%c0_12, %c0_13] : memref<16x128xf32, #tpu.memory_space<vmem>>, vector<16x128xf32>
    tpu.vector_store %arg10[%c0_12, %c0_13], %11 {strides = array<i32>} : memref<16x128xf32, #tpu.memory_space<vmem>>, vector<16x128xf32>,
    %c0_14 = arith.constant 0 : index
    %c0_15 = arith.constant 0 : index
    %13 = vector.load %arg3[%c0_14, %c0_15] : memref<32x128xf32, #tpu.memory_space<vmem>>, vector<32x128xf32>
    %c0_16 = arith.constant 0 : index
    %c0_17 = arith.constant 0 : index
    %14 = vector.load %arg6[%c0_16, %c0_17] : memref<32x128xf32, #tpu.memory_space<vmem>>, vector<32x128xf32>
    %cst_18 = arith.constant 0.000000e+00 : f32
    %15 = vector.broadcast %cst_18 : f32 to vector<2x32xf32>
    %cst_19 = arith.constant 0.000000e+00 : f32
    %16 = vector.broadcast %cst_19 : f32 to vector<2x32xf32>
    %cst_20 = arith.constant 0.000000e+00 : f32
    %17 = vector.broadcast %cst_20 : f32 to vector<2x32xf32>
    %cst_21 = arith.constant 0.000000e+00 : f32
    %18 = vector.broadcast %cst_21 : f32 to vector<2x32xf32>
    %c0_22 = arith.constant 0 : index
    %c0_23 = arith.constant 0 : index
    %19 = vector.load %arg9[%c0_22, %c0_23] : memref<16x128xf32, #tpu.memory_space<vmem>>, vector<2x128xf32>
    %cst_24 = arith.constant dense<0.000000e+00> : vector<2x128xf32>
    %20 = tpu.matmul %15, %13, %cst_24 {dimension_numbers = #tpu.dot_dimension_numbers<[1], [0], [0], [1], [0, 0, 1, 1], [], []>} : vector<2x32xf32>, vector<32x128xf32>, vector<2x128xf32> -> vector<2x128xf32>
    %21 = arith.addf %19, %20 : vector<2x128xf32>
    %22 = vector.extract_strided_slice %21 {offsets = [0, 0], sizes = [2, 32], strides = [1, 1]} : vector<2x128xf32> to vector<2x32xf32>
    %23 = arith.negf %22 : vector<2x32xf32>
    %24 = math.exp %23 : vector<2x32xf32>
    %cst_25 = arith.constant 1.000000e+00 : f32
    %25 = vector.broadcast %cst_25 : f32 to vector<2x32xf32>
    %26 = arith.addf %25, %24 : vector<2x32xf32>
    %27 = arith.divf %25, %26 : vector<2x32xf32>
    %28 = vector.extract_strided_slice %21 {offsets = [0, 32], sizes = [2, 32], strides = [1, 1]} : vector<2x128xf32> to vector<2x32xf32>
    %29 = arith.negf %28 : vector<2x32xf32>
    %30 = math.exp %29 : vector<2x32xf32>
    %cst_26 = arith.constant 1.000000e+00 : f32
    %31 = vector.broadcast %cst_26 : f32 to vector<2x32xf32>
    %32 = arith.addf %31, %30 : vector<2x32xf32>
    %33 = arith.divf %31, %32 : vector<2x32xf32>
    %34 = vector.extract_strided_slice %21 {offsets = [0, 64], sizes = [2, 32], strides = [1, 1]} : vector<2x128xf32> to vector<2x32xf32>
    %35 = math.tanh %34 : vector<2x32xf32>
    %36 = vector.extract_strided_slice %21 {offsets = [0, 96], sizes = [2, 32], strides = [1, 1]} : vector<2x128xf32> to vector<2x32xf32>
    %37 = arith.negf %36 : vector<2x32xf32>
    %38 = math.exp %37 : vector<2x32xf32>
    %cst_27 = arith.constant 1.000000e+00 : f32
    %39 = vector.broadcast %cst_27 : f32 to vector<2x32xf32>
    %40 = arith.addf %39, %38 : vector<2x32xf32>
    %41 = arith.divf %39, %40 : vector<2x32xf32>
    %42 = arith.mulf %33, %16 : vector<2x32xf32>
    %43 = arith.mulf %27, %35 : vector<2x32xf32>
    %44 = arith.addf %42, %43 : vector<2x32xf32>
    %45 = math.tanh %44 : vector<2x32xf32>
    %46 = arith.mulf %41, %45 : vector<2x32xf32>
    %c0_28 = arith.constant 0 : index
    %c0_29 = arith.constant 0 : index
    %c0_30 = arith.constant 0 : index
    %47 = vector.load %arg8[%c0_28, %c0_29, %c0_30] : memref<8x2x64xf32, #tpu.memory_space<vmem>>, vector<1x2x32xf32>
    %48 = vector.shape_cast %47 : vector<1x2x32xf32> to vector<2x32xf32>
    %49 = vector.shape_cast %46 : vector<2x32xf32> to vector<1x2x32xf32>
    tpu.vector_store %arg8[%c0_28, %c0_29, %c0_30], %49 {strides = array<i32>} : memref<8x2x64xf32, #tpu.memory_space<vmem>>, vector<1x2x32xf32>,
    %c14 = arith.constant 14 : index
    %c0_31 = arith.constant 0 : index
    %50 = vector.load %arg10[%c14, %c0_31] : memref<16x128xf32, #tpu.memory_space<vmem>>, vector<2x128xf32>
    %cst_32 = arith.constant dense<0.000000e+00> : vector<2x128xf32>
    %51 = tpu.matmul %17, %14, %cst_32 {dimension_numbers = #tpu.dot_dimension_numbers<[1], [0], [0], [1], [0, 0, 1, 1], [], []>} : vector<2x32xf32>, vector<32x128xf32>, vector<2x128xf32> -> vector<2x128xf32>
    %52 = arith.addf %50, %51 : vector<2x128xf32>
    %53 = vector.extract_strided_slice %52 {offsets = [0, 0], sizes = [2, 32], strides = [1, 1]} : vector<2x128xf32> to vector<2x32xf32>
    %54 = arith.negf %53 : vector<2x32xf32>
    %55 = math.exp %54 : vector<2x32xf32>
    %cst_33 = arith.constant 1.000000e+00 : f32
    %56 = vector.broadcast %cst_33 : f32 to vector<2x32xf32>
    %57 = arith.addf %56, %55 : vector<2x32xf32>
    %58 = arith.divf %56, %57 : vector<2x32xf32>
    %59 = vector.extract_strided_slice %52 {offsets = [0, 32], sizes = [2, 32], strides = [1, 1]} : vector<2x128xf32> to vector<2x32xf32>
    %60 = arith.negf %59 : vector<2x32xf32>
    %61 = math.exp %60 : vector<2x32xf32>
    %cst_34 = arith.constant 1.000000e+00 : f32
    %62 = vector.broadcast %cst_34 : f32 to vector<2x32xf32>
    %63 = arith.addf %62, %61 : vector<2x32xf32>
    %64 = arith.divf %62, %63 : vector<2x32xf32>
    %65 = vector.extract_strided_slice %52 {offsets = [0, 64], sizes = [2, 32], strides = [1, 1]} : vector<2x128xf32> to vector<2x32xf32>
    %66 = math.tanh %65 : vector<2x32xf32>
    %67 = vector.extract_strided_slice %52 {offsets = [0, 96], sizes = [2, 32], strides = [1, 1]} : vector<2x128xf32> to vector<2x32xf32>
    %68 = arith.negf %67 : vector<2x32xf32>
    %69 = math.exp %68 : vector<2x32xf32>
    %cst_35 = arith.constant 1.000000e+00 : f32
    %70 = vector.broadcast %cst_35 : f32 to vector<2x32xf32>
    %71 = arith.addf %70, %69 : vector<2x32xf32>
    %72 = arith.divf %70, %71 : vector<2x32xf32>
    %73 = arith.mulf %64, %18 : vector<2x32xf32>
    %74 = arith.mulf %58, %66 : vector<2x32xf32>
    %75 = arith.addf %73, %74 : vector<2x32xf32>
    %76 = math.tanh %75 : vector<2x32xf32>
    %77 = arith.mulf %72, %76 : vector<2x32xf32>
    %c7 = arith.constant 7 : index
    %c0_36 = arith.constant 0 : index
    %c32 = arith.constant 32 : index
    %78 = vector.load %arg8[%c7, %c0_36, %c32] : memref<8x2x64xf32, #tpu.memory_space<vmem>>, vector<1x2x32xf32>
    %79 = vector.shape_cast %78 : vector<1x2x32xf32> to vector<2x32xf32>
    %80 = vector.shape_cast %77 : vector<2x32xf32> to vector<1x2x32xf32>
    tpu.vector_store %arg8[%c7, %c0_36, %c32], %80 {strides = array<i32>} : memref<8x2x64xf32, #tpu.memory_space<vmem>>, vector<1x2x32xf32>,
    %c2 = arith.constant 2 : index
    %c0_37 = arith.constant 0 : index
    %81 = vector.load %arg9[%c2, %c0_37] : memref<16x128xf32, #tpu.memory_space<vmem>>, vector<2x128xf32>
    %cst_38 = arith.constant dense<0.000000e+00> : vector<2x128xf32>
    %82 = tpu.matmul %46, %13, %cst_38 {dimension_numbers = #tpu.dot_dimension_numbers<[1], [0], [0], [1], [0, 0, 1, 1], [], []>} : vector<2x32xf32>, vector<32x128xf32>, vector<2x128xf32> -> vector<2x128xf32>
    %83 = arith.addf %81, %82 : vector<2x128xf32>
    %84 = vector.extract_strided_slice %83 {offsets = [0, 0], sizes = [2, 32], strides = [1, 1]} : vector<2x128xf32> to vector<2x32xf32>
    %85 = arith.negf %84 : vector<2x32xf32>
    %86 = math.exp %85 : vector<2x32xf32>
    %cst_39 = arith.constant 1.000000e+00 : f32
    %87 = vector.broadcast %cst_39 : f32 to vector<2x32xf32>
    %88 = arith.addf %87, %86 : vector<2x32xf32>
    %89 = arith.divf %87, %88 : vector<2x32xf32>
    %90 = vector.extract_strided_slice %83 {offsets = [0, 32], sizes = [2, 32], strides = [1, 1]} : vector<2x128xf32> to vector<2x32xf32>
    %91 = arith.negf %90 : vector<2x32xf32>
    %92 = math.exp %91 : vector<2x32xf32>
    %cst_40 = arith.constant 1.000000e+00 : f32
    %93 = vector.broadcast %cst_40 : f32 to vector<2x32xf32>
    %94 = arith.addf %93, %92 : vector<2x32xf32>
    %95 = arith.divf %93, %94 : vector<2x32xf32>
    %96 = vector.extract_strided_slice %83 {offsets = [0, 64], sizes = [2, 32], strides = [1, 1]} : vector<2x128xf32> to vector<2x32xf32>
    %97 = math.tanh %96 : vector<2x32xf32>
    %98 = vector.extract_strided_slice %83 {offsets = [0, 96], sizes = [2, 32], strides = [1, 1]} : vector<2x128xf32> to vector<2x32xf32>
    %99 = arith.negf %98 : vector<2x32xf32>
    %100 = math.exp %99 : vector<2x32xf32>
    %cst_41 = arith.constant 1.000000e+00 : f32
    %101 = vector.broadcast %cst_41 : f32 to vector<2x32xf32>
    %102 = arith.addf %101, %100 : vector<2x32xf32>
    %103 = arith.divf %101, %102 : vector<2x32xf32>
    %104 = arith.mulf %95, %44 : vector<2x32xf32>
    %105 = arith.mulf %89, %97 : vector<2x32xf32>
    %106 = arith.addf %104, %105 : vector<2x32xf32>
    %107 = math.tanh %106 : vector<2x32xf32>
    %108 = arith.mulf %103, %107 : vector<2x32xf32>
    %c1 = arith.constant 1 : index
    %c0_42 = arith.constant 0 : index
    %c0_43 = arith.constant 0 : index
    %109 = vector.load %arg8[%c1, %c0_42, %c0_43] : memref<8x2x64xf32, #tpu.memory_space<vmem>>, vector<1x2x32xf32>
    %110 = vector.shape_cast %109 : vector<1x2x32xf32> to vector<2x32xf32>
    %111 = vector.shape_cast %108 : vector<2x32xf32> to vector<1x2x32xf32>
    tpu.vector_store %arg8[%c1, %c0_42, %c0_43], %111 {strides = array<i32>} : memref<8x2x64xf32, #tpu.memory_space<vmem>>, vector<1x2x32xf32>,
    %c12 = arith.constant 12 : index
    %c0_44 = arith.constant 0 : index
    %112 = vector.load %arg10[%c12, %c0_44] : memref<16x128xf32, #tpu.memory_space<vmem>>, vector<2x128xf32>
    %cst_45 = arith.constant dense<0.000000e+00> : vector<2x128xf32>
    %113 = tpu.matmul %77, %14, %cst_45 {dimension_numbers = #tpu.dot_dimension_numbers<[1], [0], [0], [1], [0, 0, 1, 1], [], []>} : vector<2x32xf32>, vector<32x128xf32>, vector<2x128xf32> -> vector<2x128xf32>
    %114 = arith.addf %112, %113 : vector<2x128xf32>
    %115 = vector.extract_strided_slice %114 {offsets = [0, 0], sizes = [2, 32], strides = [1, 1]} : vector<2x128xf32> to vector<2x32xf32>
    %116 = arith.negf %115 : vector<2x32xf32>
    %117 = math.exp %116 : vector<2x32xf32>
    %cst_46 = arith.constant 1.000000e+00 : f32
    %118 = vector.broadcast %cst_46 : f32 to vector<2x32xf32>
    %119 = arith.addf %118, %117 : vector<2x32xf32>
    %120 = arith.divf %118, %119 : vector<2x32xf32>
    %121 = vector.extract_strided_slice %114 {offsets = [0, 32], sizes = [2, 32], strides = [1, 1]} : vector<2x128xf32> to vector<2x32xf32>
    %122 = arith.negf %121 : vector<2x32xf32>
    %123 = math.exp %122 : vector<2x32xf32>
    %cst_47 = arith.constant 1.000000e+00 : f32
    %124 = vector.broadcast %cst_47 : f32 to vector<2x32xf32>
    %125 = arith.addf %124, %123 : vector<2x32xf32>
    %126 = arith.divf %124, %125 : vector<2x32xf32>
    %127 = vector.extract_strided_slice %114 {offsets = [0, 64], sizes = [2, 32], strides = [1, 1]} : vector<2x128xf32> to vector<2x32xf32>
    %128 = math.tanh %127 : vector<2x32xf32>
    %129 = vector.extract_strided_slice %114 {offsets = [0, 96], sizes = [2, 32], strides = [1, 1]} : vector<2x128xf32> to vector<2x32xf32>
    %130 = arith.negf %129 : vector<2x32xf32>
    %131 = math.exp %130 : vector<2x32xf32>
    %cst_48 = arith.constant 1.000000e+00 : f32
    %132 = vector.broadcast %cst_48 : f32 to vector<2x32xf32>
    %133 = arith.addf %132, %131 : vector<2x32xf32>
    %134 = arith.divf %132, %133 : vector<2x32xf32>
    %135 = arith.mulf %126, %75 : vector<2x32xf32>
    %136 = arith.mulf %120, %128 : vector<2x32xf32>
    %137 = arith.addf %135, %136 : vector<2x32xf32>
    %138 = math.tanh %137 : vector<2x32xf32>
    %139 = arith.mulf %134, %138 : vector<2x32xf32>
    %c6 = arith.constant 6 : index
    %c0_49 = arith.constant 0 : index
    %c32_50 = arith.constant 32 : index
    %140 = vector.load %arg8[%c6, %c0_49, %c32_50] : memref<8x2x64xf32, #tpu.memory_space<vmem>>, vector<1x2x32xf32>
    %141 = vector.shape_cast %140 : vector<1x2x32xf32> to vector<2x32xf32>
    %142 = vector.shape_cast %139 : vector<2x32xf32> to vector<1x2x32xf32>
    tpu.vector_store %arg8[%c6, %c0_49, %c32_50], %142 {strides = array<i32>} : memref<8x2x64xf32, #tpu.memory_space<vmem>>, vector<1x2x32xf32>,
    %c4 = arith.constant 4 : index
    %c0_51 = arith.constant 0 : index
    %143 = vector.load %arg9[%c4, %c0_51] : memref<16x128xf32, #tpu.memory_space<vmem>>, vector<2x128xf32>
    %cst_52 = arith.constant dense<0.000000e+00> : vector<2x128xf32>
    %144 = tpu.matmul %108, %13, %cst_52 {dimension_numbers = #tpu.dot_dimension_numbers<[1], [0], [0], [1], [0, 0, 1, 1], [], []>} : vector<2x32xf32>, vector<32x128xf32>, vector<2x128xf32> -> vector<2x128xf32>
    %145 = arith.addf %143, %144 : vector<2x128xf32>
    %146 = vector.extract_strided_slice %145 {offsets = [0, 0], sizes = [2, 32], strides = [1, 1]} : vector<2x128xf32> to vector<2x32xf32>
    %147 = arith.negf %146 : vector<2x32xf32>
    %148 = math.exp %147 : vector<2x32xf32>
    %cst_53 = arith.constant 1.000000e+00 : f32
    %149 = vector.broadcast %cst_53 : f32 to vector<2x32xf32>
    %150 = arith.addf %149, %148 : vector<2x32xf32>
    %151 = arith.divf %149, %150 : vector<2x32xf32>
    %152 = vector.extract_strided_slice %145 {offsets = [0, 32], sizes = [2, 32], strides = [1, 1]} : vector<2x128xf32> to vector<2x32xf32>
    %153 = arith.negf %152 : vector<2x32xf32>
    %154 = math.exp %153 : vector<2x32xf32>
    %cst_54 = arith.constant 1.000000e+00 : f32
    %155 = vector.broadcast %cst_54 : f32 to vector<2x32xf32>
    %156 = arith.addf %155, %154 : vector<2x32xf32>
    %157 = arith.divf %155, %156 : vector<2x32xf32>
    %158 = vector.extract_strided_slice %145 {offsets = [0, 64], sizes = [2, 32], strides = [1, 1]} : vector<2x128xf32> to vector<2x32xf32>
    %159 = math.tanh %158 : vector<2x32xf32>
    %160 = vector.extract_strided_slice %145 {offsets = [0, 96], sizes = [2, 32], strides = [1, 1]} : vector<2x128xf32> to vector<2x32xf32>
    %161 = arith.negf %160 : vector<2x32xf32>
    %162 = math.exp %161 : vector<2x32xf32>
    %cst_55 = arith.constant 1.000000e+00 : f32
    %163 = vector.broadcast %cst_55 : f32 to vector<2x32xf32>
    %164 = arith.addf %163, %162 : vector<2x32xf32>
    %165 = arith.divf %163, %164 : vector<2x32xf32>
    %166 = arith.mulf %157, %106 : vector<2x32xf32>
    %167 = arith.mulf %151, %159 : vector<2x32xf32>
    %168 = arith.addf %166, %167 : vector<2x32xf32>
    %169 = math.tanh %168 : vector<2x32xf32>
    %170 = arith.mulf %165, %169 : vector<2x32xf32>
    %c2_56 = arith.constant 2 : index
    %c0_57 = arith.constant 0 : index
    %c0_58 = arith.constant 0 : index
    %171 = vector.load %arg8[%c2_56, %c0_57, %c0_58] : memref<8x2x64xf32, #tpu.memory_space<vmem>>, vector<1x2x32xf32>
    %172 = vector.shape_cast %171 : vector<1x2x32xf32> to vector<2x32xf32>
    %173 = vector.shape_cast %170 : vector<2x32xf32> to vector<1x2x32xf32>
    tpu.vector_store %arg8[%c2_56, %c0_57, %c0_58], %173 {strides = array<i32>} : memref<8x2x64xf32, #tpu.memory_space<vmem>>, vector<1x2x32xf32>,
    %c10 = arith.constant 10 : index
    %c0_59 = arith.constant 0 : index
    %174 = vector.load %arg10[%c10, %c0_59] : memref<16x128xf32, #tpu.memory_space<vmem>>, vector<2x128xf32>
    %cst_60 = arith.constant dense<0.000000e+00> : vector<2x128xf32>
    %175 = tpu.matmul %139, %14, %cst_60 {dimension_numbers = #tpu.dot_dimension_numbers<[1], [0], [0], [1], [0, 0, 1, 1], [], []>} : vector<2x32xf32>, vector<32x128xf32>, vector<2x128xf32> -> vector<2x128xf32>
    %176 = arith.addf %174, %175 : vector<2x128xf32>
    %177 = vector.extract_strided_slice %176 {offsets = [0, 0], sizes = [2, 32], strides = [1, 1]} : vector<2x128xf32> to vector<2x32xf32>
    %178 = arith.negf %177 : vector<2x32xf32>
    %179 = math.exp %178 : vector<2x32xf32>
    %cst_61 = arith.constant 1.000000e+00 : f32
    %180 = vector.broadcast %cst_61 : f32 to vector<2x32xf32>
    %181 = arith.addf %180, %179 : vector<2x32xf32>
    %182 = arith.divf %180, %181 : vector<2x32xf32>
    %183 = vector.extract_strided_slice %176 {offsets = [0, 32], sizes = [2, 32], strides = [1, 1]} : vector<2x128xf32> to vector<2x32xf32>
    %184 = arith.negf %183 : vector<2x32xf32>
    %185 = math.exp %184 : vector<2x32xf32>
    %cst_62 = arith.constant 1.000000e+00 : f32
    %186 = vector.broadcast %cst_62 : f32 to vector<2x32xf32>
    %187 = arith.addf %186, %185 : vector<2x32xf32>
    %188 = arith.divf %186, %187 : vector<2x32xf32>
    %189 = vector.extract_strided_slice %176 {offsets = [0, 64], sizes = [2, 32], strides = [1, 1]} : vector<2x128xf32> to vector<2x32xf32>
    %190 = math.tanh %189 : vector<2x32xf32>
    %191 = vector.extract_strided_slice %176 {offsets = [0, 96], sizes = [2, 32], strides = [1, 1]} : vector<2x128xf32> to vector<2x32xf32>
    %192 = arith.negf %191 : vector<2x32xf32>
    %193 = math.exp %192 : vector<2x32xf32>
    %cst_63 = arith.constant 1.000000e+00 : f32
    %194 = vector.broadcast %cst_63 : f32 to vector<2x32xf32>
    %195 = arith.addf %194, %193 : vector<2x32xf32>
    %196 = arith.divf %194, %195 : vector<2x32xf32>
    %197 = arith.mulf %188, %137 : vector<2x32xf32>
    %198 = arith.mulf %182, %190 : vector<2x32xf32>
    %199 = arith.addf %197, %198 : vector<2x32xf32>
    %200 = math.tanh %199 : vector<2x32xf32>
    %201 = arith.mulf %196, %200 : vector<2x32xf32>
    %c5 = arith.constant 5 : index
    %c0_64 = arith.constant 0 : index
    %c32_65 = arith.constant 32 : index
    %202 = vector.load %arg8[%c5, %c0_64, %c32_65] : memref<8x2x64xf32, #tpu.memory_space<vmem>>, vector<1x2x32xf32>
    %203 = vector.shape_cast %202 : vector<1x2x32xf32> to vector<2x32xf32>
    %204 = vector.shape_cast %201 : vector<2x32xf32> to vector<1x2x32xf32>
    tpu.vector_store %arg8[%c5, %c0_64, %c32_65], %204 {strides = array<i32>} : memref<8x2x64xf32, #tpu.memory_space<vmem>>, vector<1x2x32xf32>,
    %c6_66 = arith.constant 6 : index
    %c0_67 = arith.constant 0 : index
    %205 = vector.load %arg9[%c6_66, %c0_67] : memref<16x128xf32, #tpu.memory_space<vmem>>, vector<2x128xf32>
    %cst_68 = arith.constant dense<0.000000e+00> : vector<2x128xf32>
    %206 = tpu.matmul %170, %13, %cst_68 {dimension_numbers = #tpu.dot_dimension_numbers<[1], [0], [0], [1], [0, 0, 1, 1], [], []>} : vector<2x32xf32>, vector<32x128xf32>, vector<2x128xf32> -> vector<2x128xf32>
    %207 = arith.addf %205, %206 : vector<2x128xf32>
    %208 = vector.extract_strided_slice %207 {offsets = [0, 0], sizes = [2, 32], strides = [1, 1]} : vector<2x128xf32> to vector<2x32xf32>
    %209 = arith.negf %208 : vector<2x32xf32>
    %210 = math.exp %209 : vector<2x32xf32>
    %cst_69 = arith.constant 1.000000e+00 : f32
    %211 = vector.broadcast %cst_69 : f32 to vector<2x32xf32>
    %212 = arith.addf %211, %210 : vector<2x32xf32>
    %213 = arith.divf %211, %212 : vector<2x32xf32>
    %214 = vector.extract_strided_slice %207 {offsets = [0, 32], sizes = [2, 32], strides = [1, 1]} : vector<2x128xf32> to vector<2x32xf32>
    %215 = arith.negf %214 : vector<2x32xf32>
    %216 = math.exp %215 : vector<2x32xf32>
    %cst_70 = arith.constant 1.000000e+00 : f32
    %217 = vector.broadcast %cst_70 : f32 to vector<2x32xf32>
    %218 = arith.addf %217, %216 : vector<2x32xf32>
    %219 = arith.divf %217, %218 : vector<2x32xf32>
    %220 = vector.extract_strided_slice %207 {offsets = [0, 64], sizes = [2, 32], strides = [1, 1]} : vector<2x128xf32> to vector<2x32xf32>
    %221 = math.tanh %220 : vector<2x32xf32>
    %222 = vector.extract_strided_slice %207 {offsets = [0, 96], sizes = [2, 32], strides = [1, 1]} : vector<2x128xf32> to vector<2x32xf32>
    %223 = arith.negf %222 : vector<2x32xf32>
    %224 = math.exp %223 : vector<2x32xf32>
    %cst_71 = arith.constant 1.000000e+00 : f32
    %225 = vector.broadcast %cst_71 : f32 to vector<2x32xf32>
    %226 = arith.addf %225, %224 : vector<2x32xf32>
    %227 = arith.divf %225, %226 : vector<2x32xf32>
    %228 = arith.mulf %219, %168 : vector<2x32xf32>
    %229 = arith.mulf %213, %221 : vector<2x32xf32>
    %230 = arith.addf %228, %229 : vector<2x32xf32>
    %231 = math.tanh %230 : vector<2x32xf32>
    %232 = arith.mulf %227, %231 : vector<2x32xf32>
    %c3 = arith.constant 3 : index
    %c0_72 = arith.constant 0 : index
    %c0_73 = arith.constant 0 : index
    %233 = vector.load %arg8[%c3, %c0_72, %c0_73] : memref<8x2x64xf32, #tpu.memory_space<vmem>>, vector<1x2x32xf32>
    %234 = vector.shape_cast %233 : vector<1x2x32xf32> to vector<2x32xf32>
    %235 = vector.shape_cast %232 : vector<2x32xf32> to vector<1x2x32xf32>
    tpu.vector_store %arg8[%c3, %c0_72, %c0_73], %235 {strides = array<i32>} : memref<8x2x64xf32, #tpu.memory_space<vmem>>, vector<1x2x32xf32>,
    %c8 = arith.constant 8 : index
    %c0_74 = arith.constant 0 : index
    %236 = vector.load %arg10[%c8, %c0_74] : memref<16x128xf32, #tpu.memory_space<vmem>>, vector<2x128xf32>
    %cst_75 = arith.constant dense<0.000000e+00> : vector<2x128xf32>
    %237 = tpu.matmul %201, %14, %cst_75 {dimension_numbers = #tpu.dot_dimension_numbers<[1], [0], [0], [1], [0, 0, 1, 1], [], []>} : vector<2x32xf32>, vector<32x128xf32>, vector<2x128xf32> -> vector<2x128xf32>
    %238 = arith.addf %236, %237 : vector<2x128xf32>
    %239 = vector.extract_strided_slice %238 {offsets = [0, 0], sizes = [2, 32], strides = [1, 1]} : vector<2x128xf32> to vector<2x32xf32>
    %240 = arith.negf %239 : vector<2x32xf32>
    %241 = math.exp %240 : vector<2x32xf32>
    %cst_76 = arith.constant 1.000000e+00 : f32
    %242 = vector.broadcast %cst_76 : f32 to vector<2x32xf32>
    %243 = arith.addf %242, %241 : vector<2x32xf32>
    %244 = arith.divf %242, %243 : vector<2x32xf32>
    %245 = vector.extract_strided_slice %238 {offsets = [0, 32], sizes = [2, 32], strides = [1, 1]} : vector<2x128xf32> to vector<2x32xf32>
    %246 = arith.negf %245 : vector<2x32xf32>
    %247 = math.exp %246 : vector<2x32xf32>
    %cst_77 = arith.constant 1.000000e+00 : f32
    %248 = vector.broadcast %cst_77 : f32 to vector<2x32xf32>
    %249 = arith.addf %248, %247 : vector<2x32xf32>
    %250 = arith.divf %248, %249 : vector<2x32xf32>
    %251 = vector.extract_strided_slice %238 {offsets = [0, 64], sizes = [2, 32], strides = [1, 1]} : vector<2x128xf32> to vector<2x32xf32>
    %252 = math.tanh %251 : vector<2x32xf32>
    %253 = vector.extract_strided_slice %238 {offsets = [0, 96], sizes = [2, 32], strides = [1, 1]} : vector<2x128xf32> to vector<2x32xf32>
    %254 = arith.negf %253 : vector<2x32xf32>
    %255 = math.exp %254 : vector<2x32xf32>
    %cst_78 = arith.constant 1.000000e+00 : f32
    %256 = vector.broadcast %cst_78 : f32 to vector<2x32xf32>
    %257 = arith.addf %256, %255 : vector<2x32xf32>
    %258 = arith.divf %256, %257 : vector<2x32xf32>
    %259 = arith.mulf %250, %199 : vector<2x32xf32>
    %260 = arith.mulf %244, %252 : vector<2x32xf32>
    %261 = arith.addf %259, %260 : vector<2x32xf32>
    %262 = math.tanh %261 : vector<2x32xf32>
    %263 = arith.mulf %258, %262 : vector<2x32xf32>
    %c4_79 = arith.constant 4 : index
    %c0_80 = arith.constant 0 : index
    %c32_81 = arith.constant 32 : index
    %264 = vector.load %arg8[%c4_79, %c0_80, %c32_81] : memref<8x2x64xf32, #tpu.memory_space<vmem>>, vector<1x2x32xf32>
    %265 = vector.shape_cast %264 : vector<1x2x32xf32> to vector<2x32xf32>
    %266 = vector.shape_cast %263 : vector<2x32xf32> to vector<1x2x32xf32>
    tpu.vector_store %arg8[%c4_79, %c0_80, %c32_81], %266 {strides = array<i32>} : memref<8x2x64xf32, #tpu.memory_space<vmem>>, vector<1x2x32xf32>,
    %c8_82 = arith.constant 8 : index
    %c0_83 = arith.constant 0 : index
    %267 = vector.load %arg9[%c8_82, %c0_83] : memref<16x128xf32, #tpu.memory_space<vmem>>, vector<2x128xf32>
    %cst_84 = arith.constant dense<0.000000e+00> : vector<2x128xf32>
    %268 = tpu.matmul %232, %13, %cst_84 {dimension_numbers = #tpu.dot_dimension_numbers<[1], [0], [0], [1], [0, 0, 1, 1], [], []>} : vector<2x32xf32>, vector<32x128xf32>, vector<2x128xf32> -> vector<2x128xf32>
    %269 = arith.addf %267, %268 : vector<2x128xf32>
    %270 = vector.extract_strided_slice %269 {offsets = [0, 0], sizes = [2, 32], strides = [1, 1]} : vector<2x128xf32> to vector<2x32xf32>
    %271 = arith.negf %270 : vector<2x32xf32>
    %272 = math.exp %271 : vector<2x32xf32>
    %cst_85 = arith.constant 1.000000e+00 : f32
    %273 = vector.broadcast %cst_85 : f32 to vector<2x32xf32>
    %274 = arith.addf %273, %272 : vector<2x32xf32>
    %275 = arith.divf %273, %274 : vector<2x32xf32>
    %276 = vector.extract_strided_slice %269 {offsets = [0, 32], sizes = [2, 32], strides = [1, 1]} : vector<2x128xf32> to vector<2x32xf32>
    %277 = arith.negf %276 : vector<2x32xf32>
    %278 = math.exp %277 : vector<2x32xf32>
    %cst_86 = arith.constant 1.000000e+00 : f32
    %279 = vector.broadcast %cst_86 : f32 to vector<2x32xf32>
    %280 = arith.addf %279, %278 : vector<2x32xf32>
    %281 = arith.divf %279, %280 : vector<2x32xf32>
    %282 = vector.extract_strided_slice %269 {offsets = [0, 64], sizes = [2, 32], strides = [1, 1]} : vector<2x128xf32> to vector<2x32xf32>
    %283 = math.tanh %282 : vector<2x32xf32>
    %284 = vector.extract_strided_slice %269 {offsets = [0, 96], sizes = [2, 32], strides = [1, 1]} : vector<2x128xf32> to vector<2x32xf32>
    %285 = arith.negf %284 : vector<2x32xf32>
    %286 = math.exp %285 : vector<2x32xf32>
    %cst_87 = arith.constant 1.000000e+00 : f32
    %287 = vector.broadcast %cst_87 : f32 to vector<2x32xf32>
    %288 = arith.addf %287, %286 : vector<2x32xf32>
    %289 = arith.divf %287, %288 : vector<2x32xf32>
    %290 = arith.mulf %281, %230 : vector<2x32xf32>
    %291 = arith.mulf %275, %283 : vector<2x32xf32>
    %292 = arith.addf %290, %291 : vector<2x32xf32>
    %293 = math.tanh %292 : vector<2x32xf32>
    %294 = arith.mulf %289, %293 : vector<2x32xf32>
    %c4_88 = arith.constant 4 : index
    %c0_89 = arith.constant 0 : index
    %c0_90 = arith.constant 0 : index
    %295 = vector.load %arg8[%c4_88, %c0_89, %c0_90] : memref<8x2x64xf32, #tpu.memory_space<vmem>>, vector<1x2x32xf32>
    %296 = vector.shape_cast %295 : vector<1x2x32xf32> to vector<2x32xf32>
    %297 = vector.shape_cast %294 : vector<2x32xf32> to vector<1x2x32xf32>
    tpu.vector_store %arg8[%c4_88, %c0_89, %c0_90], %297 {strides = array<i32>} : memref<8x2x64xf32, #tpu.memory_space<vmem>>, vector<1x2x32xf32>,
    %c6_91 = arith.constant 6 : index
    %c0_92 = arith.constant 0 : index
    %298 = vector.load %arg10[%c6_91, %c0_92] : memref<16x128xf32, #tpu.memory_space<vmem>>, vector<2x128xf32>
    %cst_93 = arith.constant dense<0.000000e+00> : vector<2x128xf32>
    %299 = tpu.matmul %263, %14, %cst_93 {dimension_numbers = #tpu.dot_dimension_numbers<[1], [0], [0], [1], [0, 0, 1, 1], [], []>} : vector<2x32xf32>, vector<32x128xf32>, vector<2x128xf32> -> vector<2x128xf32>
    %300 = arith.addf %298, %299 : vector<2x128xf32>
    %301 = vector.extract_strided_slice %300 {offsets = [0, 0], sizes = [2, 32], strides = [1, 1]} : vector<2x128xf32> to vector<2x32xf32>
    %302 = arith.negf %301 : vector<2x32xf32>
    %303 = math.exp %302 : vector<2x32xf32>
    %cst_94 = arith.constant 1.000000e+00 : f32
    %304 = vector.broadcast %cst_94 : f32 to vector<2x32xf32>
    %305 = arith.addf %304, %303 : vector<2x32xf32>
    %306 = arith.divf %304, %305 : vector<2x32xf32>
    %307 = vector.extract_strided_slice %300 {offsets = [0, 32], sizes = [2, 32], strides = [1, 1]} : vector<2x128xf32> to vector<2x32xf32>
    %308 = arith.negf %307 : vector<2x32xf32>
    %309 = math.exp %308 : vector<2x32xf32>
    %cst_95 = arith.constant 1.000000e+00 : f32
    %310 = vector.broadcast %cst_95 : f32 to vector<2x32xf32>
    %311 = arith.addf %310, %309 : vector<2x32xf32>
    %312 = arith.divf %310, %311 : vector<2x32xf32>
    %313 = vector.extract_strided_slice %300 {offsets = [0, 64], sizes = [2, 32], strides = [1, 1]} : vector<2x128xf32> to vector<2x32xf32>
    %314 = math.tanh %313 : vector<2x32xf32>
    %315 = vector.extract_strided_slice %300 {offsets = [0, 96], sizes = [2, 32], strides = [1, 1]} : vector<2x128xf32> to vector<2x32xf32>
    %316 = arith.negf %315 : vector<2x32xf32>
    %317 = math.exp %316 : vector<2x32xf32>
    %cst_96 = arith.constant 1.000000e+00 : f32
    %318 = vector.broadcast %cst_96 : f32 to vector<2x32xf32>
    %319 = arith.addf %318, %317 : vector<2x32xf32>
    %320 = arith.divf %318, %319 : vector<2x32xf32>
    %321 = arith.mulf %312, %261 : vector<2x32xf32>
    %322 = arith.mulf %306, %314 : vector<2x32xf32>
    %323 = arith.addf %321, %322 : vector<2x32xf32>
    %324 = math.tanh %323 : vector<2x32xf32>
    %325 = arith.mulf %320, %324 : vector<2x32xf32>
    %c3_97 = arith.constant 3 : index
    %c0_98 = arith.constant 0 : index
    %c32_99 = arith.constant 32 : index
    %326 = vector.load %arg8[%c3_97, %c0_98, %c32_99] : memref<8x2x64xf32, #tpu.memory_space<vmem>>, vector<1x2x32xf32>
    %327 = vector.shape_cast %326 : vector<1x2x32xf32> to vector<2x32xf32>
    %328 = vector.shape_cast %325 : vector<2x32xf32> to vector<1x2x32xf32>
    tpu.vector_store %arg8[%c3_97, %c0_98, %c32_99], %328 {strides = array<i32>} : memref<8x2x64xf32, #tpu.memory_space<vmem>>, vector<1x2x32xf32>,
    %c10_100 = arith.constant 10 : index
    %c0_101 = arith.constant 0 : index
    %329 = vector.load %arg9[%c10_100, %c0_101] : memref<16x128xf32, #tpu.memory_space<vmem>>, vector<2x128xf32>
    %cst_102 = arith.constant dense<0.000000e+00> : vector<2x128xf32>
    %330 = tpu.matmul %294, %13, %cst_102 {dimension_numbers = #tpu.dot_dimension_numbers<[1], [0], [0], [1], [0, 0, 1, 1], [], []>} : vector<2x32xf32>, vector<32x128xf32>, vector<2x128xf32> -> vector<2x128xf32>
    %331 = arith.addf %329, %330 : vector<2x128xf32>
    %332 = vector.extract_strided_slice %331 {offsets = [0, 0], sizes = [2, 32], strides = [1, 1]} : vector<2x128xf32> to vector<2x32xf32>
    %333 = arith.negf %332 : vector<2x32xf32>
    %334 = math.exp %333 : vector<2x32xf32>
    %cst_103 = arith.constant 1.000000e+00 : f32
    %335 = vector.broadcast %cst_103 : f32 to vector<2x32xf32>
    %336 = arith.addf %335, %334 : vector<2x32xf32>
    %337 = arith.divf %335, %336 : vector<2x32xf32>
    %338 = vector.extract_strided_slice %331 {offsets = [0, 32], sizes = [2, 32], strides = [1, 1]} : vector<2x128xf32> to vector<2x32xf32>
    %339 = arith.negf %338 : vector<2x32xf32>
    %340 = math.exp %339 : vector<2x32xf32>
    %cst_104 = arith.constant 1.000000e+00 : f32
    %341 = vector.broadcast %cst_104 : f32 to vector<2x32xf32>
    %342 = arith.addf %341, %340 : vector<2x32xf32>
    %343 = arith.divf %341, %342 : vector<2x32xf32>
    %344 = vector.extract_strided_slice %331 {offsets = [0, 64], sizes = [2, 32], strides = [1, 1]} : vector<2x128xf32> to vector<2x32xf32>
    %345 = math.tanh %344 : vector<2x32xf32>
    %346 = vector.extract_strided_slice %331 {offsets = [0, 96], sizes = [2, 32], strides = [1, 1]} : vector<2x128xf32> to vector<2x32xf32>
    %347 = arith.negf %346 : vector<2x32xf32>
    %348 = math.exp %347 : vector<2x32xf32>
    %cst_105 = arith.constant 1.000000e+00 : f32
    %349 = vector.broadcast %cst_105 : f32 to vector<2x32xf32>
    %350 = arith.addf %349, %348 : vector<2x32xf32>
    %351 = arith.divf %349, %350 : vector<2x32xf32>
    %352 = arith.mulf %343, %292 : vector<2x32xf32>
    %353 = arith.mulf %337, %345 : vector<2x32xf32>
    %354 = arith.addf %352, %353 : vector<2x32xf32>
    %355 = math.tanh %354 : vector<2x32xf32>
    %356 = arith.mulf %351, %355 : vector<2x32xf32>
    %c5_106 = arith.constant 5 : index
    %c0_107 = arith.constant 0 : index
    %c0_108 = arith.constant 0 : index
    %357 = vector.load %arg8[%c5_106, %c0_107, %c0_108] : memref<8x2x64xf32, #tpu.memory_space<vmem>>, vector<1x2x32xf32>
    %358 = vector.shape_cast %357 : vector<1x2x32xf32> to vector<2x32xf32>
    %359 = vector.shape_cast %356 : vector<2x32xf32> to vector<1x2x32xf32>
    tpu.vector_store %arg8[%c5_106, %c0_107, %c0_108], %359 {strides = array<i32>} : memref<8x2x64xf32, #tpu.memory_space<vmem>>, vector<1x2x32xf32>,
    %c4_109 = arith.constant 4 : index
    %c0_110 = arith.constant 0 : index
    %360 = vector.load %arg10[%c4_109, %c0_110] : memref<16x128xf32, #tpu.memory_space<vmem>>, vector<2x128xf32>
    %cst_111 = arith.constant dense<0.000000e+00> : vector<2x128xf32>
    %361 = tpu.matmul %325, %14, %cst_111 {dimension_numbers = #tpu.dot_dimension_numbers<[1], [0], [0], [1], [0, 0, 1, 1], [], []>} : vector<2x32xf32>, vector<32x128xf32>, vector<2x128xf32> -> vector<2x128xf32>
    %362 = arith.addf %360, %361 : vector<2x128xf32>
    %363 = vector.extract_strided_slice %362 {offsets = [0, 0], sizes = [2, 32], strides = [1, 1]} : vector<2x128xf32> to vector<2x32xf32>
    %364 = arith.negf %363 : vector<2x32xf32>
    %365 = math.exp %364 : vector<2x32xf32>
    %cst_112 = arith.constant 1.000000e+00 : f32
    %366 = vector.broadcast %cst_112 : f32 to vector<2x32xf32>
    %367 = arith.addf %366, %365 : vector<2x32xf32>
    %368 = arith.divf %366, %367 : vector<2x32xf32>
    %369 = vector.extract_strided_slice %362 {offsets = [0, 32], sizes = [2, 32], strides = [1, 1]} : vector<2x128xf32> to vector<2x32xf32>
    %370 = arith.negf %369 : vector<2x32xf32>
    %371 = math.exp %370 : vector<2x32xf32>
    %cst_113 = arith.constant 1.000000e+00 : f32
    %372 = vector.broadcast %cst_113 : f32 to vector<2x32xf32>
    %373 = arith.addf %372, %371 : vector<2x32xf32>
    %374 = arith.divf %372, %373 : vector<2x32xf32>
    %375 = vector.extract_strided_slice %362 {offsets = [0, 64], sizes = [2, 32], strides = [1, 1]} : vector<2x128xf32> to vector<2x32xf32>
    %376 = math.tanh %375 : vector<2x32xf32>
    %377 = vector.extract_strided_slice %362 {offsets = [0, 96], sizes = [2, 32], strides = [1, 1]} : vector<2x128xf32> to vector<2x32xf32>
    %378 = arith.negf %377 : vector<2x32xf32>
    %379 = math.exp %378 : vector<2x32xf32>
    %cst_114 = arith.constant 1.000000e+00 : f32
    %380 = vector.broadcast %cst_114 : f32 to vector<2x32xf32>
    %381 = arith.addf %380, %379 : vector<2x32xf32>
    %382 = arith.divf %380, %381 : vector<2x32xf32>
    %383 = arith.mulf %374, %323 : vector<2x32xf32>
    %384 = arith.mulf %368, %376 : vector<2x32xf32>
    %385 = arith.addf %383, %384 : vector<2x32xf32>
    %386 = math.tanh %385 : vector<2x32xf32>
    %387 = arith.mulf %382, %386 : vector<2x32xf32>
    %c2_115 = arith.constant 2 : index
    %c0_116 = arith.constant 0 : index
    %c32_117 = arith.constant 32 : index
    %388 = vector.load %arg8[%c2_115, %c0_116, %c32_117] : memref<8x2x64xf32, #tpu.memory_space<vmem>>, vector<1x2x32xf32>
    %389 = vector.shape_cast %388 : vector<1x2x32xf32> to vector<2x32xf32>
    %390 = vector.shape_cast %387 : vector<2x32xf32> to vector<1x2x32xf32>
    tpu.vector_store %arg8[%c2_115, %c0_116, %c32_117], %390 {strides = array<i32>} : memref<8x2x64xf32, #tpu.memory_space<vmem>>, vector<1x2x32xf32>,
    %c12_118 = arith.constant 12 : index
    %c0_119 = arith.constant 0 : index
    %391 = vector.load %arg9[%c12_118, %c0_119] : memref<16x128xf32, #tpu.memory_space<vmem>>, vector<2x128xf32>
    %cst_120 = arith.constant dense<0.000000e+00> : vector<2x128xf32>
    %392 = tpu.matmul %356, %13, %cst_120 {dimension_numbers = #tpu.dot_dimension_numbers<[1], [0], [0], [1], [0, 0, 1, 1], [], []>} : vector<2x32xf32>, vector<32x128xf32>, vector<2x128xf32> -> vector<2x128xf32>
    %393 = arith.addf %391, %392 : vector<2x128xf32>
    %394 = vector.extract_strided_slice %393 {offsets = [0, 0], sizes = [2, 32], strides = [1, 1]} : vector<2x128xf32> to vector<2x32xf32>
    %395 = arith.negf %394 : vector<2x32xf32>
    %396 = math.exp %395 : vector<2x32xf32>
    %cst_121 = arith.constant 1.000000e+00 : f32
    %397 = vector.broadcast %cst_121 : f32 to vector<2x32xf32>
    %398 = arith.addf %397, %396 : vector<2x32xf32>
    %399 = arith.divf %397, %398 : vector<2x32xf32>
    %400 = vector.extract_strided_slice %393 {offsets = [0, 32], sizes = [2, 32], strides = [1, 1]} : vector<2x128xf32> to vector<2x32xf32>
    %401 = arith.negf %400 : vector<2x32xf32>
    %402 = math.exp %401 : vector<2x32xf32>
    %cst_122 = arith.constant 1.000000e+00 : f32
    %403 = vector.broadcast %cst_122 : f32 to vector<2x32xf32>
    %404 = arith.addf %403, %402 : vector<2x32xf32>
    %405 = arith.divf %403, %404 : vector<2x32xf32>
    %406 = vector.extract_strided_slice %393 {offsets = [0, 64], sizes = [2, 32], strides = [1, 1]} : vector<2x128xf32> to vector<2x32xf32>
    %407 = math.tanh %406 : vector<2x32xf32>
    %408 = vector.extract_strided_slice %393 {offsets = [0, 96], sizes = [2, 32], strides = [1, 1]} : vector<2x128xf32> to vector<2x32xf32>
    %409 = arith.negf %408 : vector<2x32xf32>
    %410 = math.exp %409 : vector<2x32xf32>
    %cst_123 = arith.constant 1.000000e+00 : f32
    %411 = vector.broadcast %cst_123 : f32 to vector<2x32xf32>
    %412 = arith.addf %411, %410 : vector<2x32xf32>
    %413 = arith.divf %411, %412 : vector<2x32xf32>
    %414 = arith.mulf %405, %354 : vector<2x32xf32>
    %415 = arith.mulf %399, %407 : vector<2x32xf32>
    %416 = arith.addf %414, %415 : vector<2x32xf32>
    %417 = math.tanh %416 : vector<2x32xf32>
    %418 = arith.mulf %413, %417 : vector<2x32xf32>
    %c6_124 = arith.constant 6 : index
    %c0_125 = arith.constant 0 : index
    %c0_126 = arith.constant 0 : index
    %419 = vector.load %arg8[%c6_124, %c0_125, %c0_126] : memref<8x2x64xf32, #tpu.memory_space<vmem>>, vector<1x2x32xf32>
    %420 = vector.shape_cast %419 : vector<1x2x32xf32> to vector<2x32xf32>
    %421 = vector.shape_cast %418 : vector<2x32xf32> to vector<1x2x32xf32>
    tpu.vector_store %arg8[%c6_124, %c0_125, %c0_126], %421 {strides = array<i32>} : memref<8x2x64xf32, #tpu.memory_space<vmem>>, vector<1x2x32xf32>,
    %c2_127 = arith.constant 2 : index
    %c0_128 = arith.constant 0 : index
    %422 = vector.load %arg10[%c2_127, %c0_128] : memref<16x128xf32, #tpu.memory_space<vmem>>, vector<2x128xf32>
    %cst_129 = arith.constant dense<0.000000e+00> : vector<2x128xf32>
    %423 = tpu.matmul %387, %14, %cst_129 {dimension_numbers = #tpu.dot_dimension_numbers<[1], [0], [0], [1], [0, 0, 1, 1], [], []>} : vector<2x32xf32>, vector<32x128xf32>, vector<2x128xf32> -> vector<2x128xf32>
    %424 = arith.addf %422, %423 : vector<2x128xf32>
    %425 = vector.extract_strided_slice %424 {offsets = [0, 0], sizes = [2, 32], strides = [1, 1]} : vector<2x128xf32> to vector<2x32xf32>
    %426 = arith.negf %425 : vector<2x32xf32>
    %427 = math.exp %426 : vector<2x32xf32>
    %cst_130 = arith.constant 1.000000e+00 : f32
    %428 = vector.broadcast %cst_130 : f32 to vector<2x32xf32>
    %429 = arith.addf %428, %427 : vector<2x32xf32>
    %430 = arith.divf %428, %429 : vector<2x32xf32>
    %431 = vector.extract_strided_slice %424 {offsets = [0, 32], sizes = [2, 32], strides = [1, 1]} : vector<2x128xf32> to vector<2x32xf32>
    %432 = arith.negf %431 : vector<2x32xf32>
    %433 = math.exp %432 : vector<2x32xf32>
    %cst_131 = arith.constant 1.000000e+00 : f32
    %434 = vector.broadcast %cst_131 : f32 to vector<2x32xf32>
    %435 = arith.addf %434, %433 : vector<2x32xf32>
    %436 = arith.divf %434, %435 : vector<2x32xf32>
    %437 = vector.extract_strided_slice %424 {offsets = [0, 64], sizes = [2, 32], strides = [1, 1]} : vector<2x128xf32> to vector<2x32xf32>
    %438 = math.tanh %437 : vector<2x32xf32>
    %439 = vector.extract_strided_slice %424 {offsets = [0, 96], sizes = [2, 32], strides = [1, 1]} : vector<2x128xf32> to vector<2x32xf32>
    %440 = arith.negf %439 : vector<2x32xf32>
    %441 = math.exp %440 : vector<2x32xf32>
    %cst_132 = arith.constant 1.000000e+00 : f32
    %442 = vector.broadcast %cst_132 : f32 to vector<2x32xf32>
    %443 = arith.addf %442, %441 : vector<2x32xf32>
    %444 = arith.divf %442, %443 : vector<2x32xf32>
    %445 = arith.mulf %436, %385 : vector<2x32xf32>
    %446 = arith.mulf %430, %438 : vector<2x32xf32>
    %447 = arith.addf %445, %446 : vector<2x32xf32>
    %448 = math.tanh %447 : vector<2x32xf32>
    %449 = arith.mulf %444, %448 : vector<2x32xf32>
    %c1_133 = arith.constant 1 : index
    %c0_134 = arith.constant 0 : index
    %c32_135 = arith.constant 32 : index
    %450 = vector.load %arg8[%c1_133, %c0_134, %c32_135] : memref<8x2x64xf32, #tpu.memory_space<vmem>>, vector<1x2x32xf32>
    %451 = vector.shape_cast %450 : vector<1x2x32xf32> to vector<2x32xf32>
    %452 = vector.shape_cast %449 : vector<2x32xf32> to vector<1x2x32xf32>
    tpu.vector_store %arg8[%c1_133, %c0_134, %c32_135], %452 {strides = array<i32>} : memref<8x2x64xf32, #tpu.memory_space<vmem>>, vector<1x2x32xf32>,
    %c14_136 = arith.constant 14 : index
    %c0_137 = arith.constant 0 : index
    %453 = vector.load %arg9[%c14_136, %c0_137] : memref<16x128xf32, #tpu.memory_space<vmem>>, vector<2x128xf32>
    %cst_138 = arith.constant dense<0.000000e+00> : vector<2x128xf32>
    %454 = tpu.matmul %418, %13, %cst_138 {dimension_numbers = #tpu.dot_dimension_numbers<[1], [0], [0], [1], [0, 0, 1, 1], [], []>} : vector<2x32xf32>, vector<32x128xf32>, vector<2x128xf32> -> vector<2x128xf32>
    %455 = arith.addf %453, %454 : vector<2x128xf32>
    %456 = vector.extract_strided_slice %455 {offsets = [0, 0], sizes = [2, 32], strides = [1, 1]} : vector<2x128xf32> to vector<2x32xf32>
    %457 = arith.negf %456 : vector<2x32xf32>
    %458 = math.exp %457 : vector<2x32xf32>
    %cst_139 = arith.constant 1.000000e+00 : f32
    %459 = vector.broadcast %cst_139 : f32 to vector<2x32xf32>
    %460 = arith.addf %459, %458 : vector<2x32xf32>
    %461 = arith.divf %459, %460 : vector<2x32xf32>
    %462 = vector.extract_strided_slice %455 {offsets = [0, 32], sizes = [2, 32], strides = [1, 1]} : vector<2x128xf32> to vector<2x32xf32>
    %463 = arith.negf %462 : vector<2x32xf32>
    %464 = math.exp %463 : vector<2x32xf32>
    %cst_140 = arith.constant 1.000000e+00 : f32
    %465 = vector.broadcast %cst_140 : f32 to vector<2x32xf32>
    %466 = arith.addf %465, %464 : vector<2x32xf32>
    %467 = arith.divf %465, %466 : vector<2x32xf32>
    %468 = vector.extract_strided_slice %455 {offsets = [0, 64], sizes = [2, 32], strides = [1, 1]} : vector<2x128xf32> to vector<2x32xf32>
    %469 = math.tanh %468 : vector<2x32xf32>
    %470 = vector.extract_strided_slice %455 {offsets = [0, 96], sizes = [2, 32], strides = [1, 1]} : vector<2x128xf32> to vector<2x32xf32>
    %471 = arith.negf %470 : vector<2x32xf32>
    %472 = math.exp %471 : vector<2x32xf32>
    %cst_141 = arith.constant 1.000000e+00 : f32
    %473 = vector.broadcast %cst_141 : f32 to vector<2x32xf32>
    %474 = arith.addf %473, %472 : vector<2x32xf32>
    %475 = arith.divf %473, %474 : vector<2x32xf32>
    %476 = arith.mulf %467, %416 : vector<2x32xf32>
    %477 = arith.mulf %461, %469 : vector<2x32xf32>
    %478 = arith.addf %476, %477 : vector<2x32xf32>
    %479 = math.tanh %478 : vector<2x32xf32>
    %480 = arith.mulf %475, %479 : vector<2x32xf32>
    %c7_142 = arith.constant 7 : index
    %c0_143 = arith.constant 0 : index
    %c0_144 = arith.constant 0 : index
    %481 = vector.load %arg8[%c7_142, %c0_143, %c0_144] : memref<8x2x64xf32, #tpu.memory_space<vmem>>, vector<1x2x32xf32>
    %482 = vector.shape_cast %481 : vector<1x2x32xf32> to vector<2x32xf32>
    %483 = vector.shape_cast %480 : vector<2x32xf32> to vector<1x2x32xf32>
    tpu.vector_store %arg8[%c7_142, %c0_143, %c0_144], %483 {strides = array<i32>} : memref<8x2x64xf32, #tpu.memory_space<vmem>>, vector<1x2x32xf32>,
    %c0_145 = arith.constant 0 : index
    %c0_146 = arith.constant 0 : index
    %484 = vector.load %arg10[%c0_145, %c0_146] : memref<16x128xf32, #tpu.memory_space<vmem>>, vector<2x128xf32>
    %cst_147 = arith.constant dense<0.000000e+00> : vector<2x128xf32>
    %485 = tpu.matmul %449, %14, %cst_147 {dimension_numbers = #tpu.dot_dimension_numbers<[1], [0], [0], [1], [0, 0, 1, 1], [], []>} : vector<2x32xf32>, vector<32x128xf32>, vector<2x128xf32> -> vector<2x128xf32>
    %486 = arith.addf %484, %485 : vector<2x128xf32>
    %487 = vector.extract_strided_slice %486 {offsets = [0, 0], sizes = [2, 32], strides = [1, 1]} : vector<2x128xf32> to vector<2x32xf32>
    %488 = arith.negf %487 : vector<2x32xf32>
    %489 = math.exp %488 : vector<2x32xf32>
    %cst_148 = arith.constant 1.000000e+00 : f32
    %490 = vector.broadcast %cst_148 : f32 to vector<2x32xf32>
    %491 = arith.addf %490, %489 : vector<2x32xf32>
    %492 = arith.divf %490, %491 : vector<2x32xf32>
    %493 = vector.extract_strided_slice %486 {offsets = [0, 32], sizes = [2, 32], strides = [1, 1]} : vector<2x128xf32> to vector<2x32xf32>
    %494 = arith.negf %493 : vector<2x32xf32>
    %495 = math.exp %494 : vector<2x32xf32>
    %cst_149 = arith.constant 1.000000e+00 : f32
    %496 = vector.broadcast %cst_149 : f32 to vector<2x32xf32>
    %497 = arith.addf %496, %495 : vector<2x32xf32>
    %498 = arith.divf %496, %497 : vector<2x32xf32>
    %499 = vector.extract_strided_slice %486 {offsets = [0, 64], sizes = [2, 32], strides = [1, 1]} : vector<2x128xf32> to vector<2x32xf32>
    %500 = math.tanh %499 : vector<2x32xf32>
    %501 = vector.extract_strided_slice %486 {offsets = [0, 96], sizes = [2, 32], strides = [1, 1]} : vector<2x128xf32> to vector<2x32xf32>
    %502 = arith.negf %501 : vector<2x32xf32>
    %503 = math.exp %502 : vector<2x32xf32>
    %cst_150 = arith.constant 1.000000e+00 : f32
    %504 = vector.broadcast %cst_150 : f32 to vector<2x32xf32>
    %505 = arith.addf %504, %503 : vector<2x32xf32>
    %506 = arith.divf %504, %505 : vector<2x32xf32>
    %507 = arith.mulf %498, %447 : vector<2x32xf32>
    %508 = arith.mulf %492, %500 : vector<2x32xf32>
    %509 = arith.addf %507, %508 : vector<2x32xf32>
    %510 = math.tanh %509 : vector<2x32xf32>
    %511 = arith.mulf %506, %510 : vector<2x32xf32>
    %c0_151 = arith.constant 0 : index
    %c0_152 = arith.constant 0 : index
    %c32_153 = arith.constant 32 : index
    %512 = vector.load %arg8[%c0_151, %c0_152, %c32_153] : memref<8x2x64xf32, #tpu.memory_space<vmem>>, vector<1x2x32xf32>
    %513 = vector.shape_cast %512 : vector<1x2x32xf32> to vector<2x32xf32>
    %514 = vector.shape_cast %511 : vector<2x32xf32> to vector<1x2x32xf32>
    tpu.vector_store %arg8[%c0_151, %c0_152, %c32_153], %514 {strides = array<i32>} : memref<8x2x64xf32, #tpu.memory_space<vmem>>, vector<1x2x32xf32>,
    return
  }
  func.func @transform_0(%arg0: i32) -> (i32, i32) {
    %c0_i32 = arith.constant 0 : i32
    %c0_i32_0 = arith.constant 0 : i32
    %c0_i32_1 = arith.constant 0 : i32
    return %c0_i32, %c0_i32_0 : i32, i32
  }
  func.func @transform_1(%arg0: i32) -> (i32, i32) {
    %c0_i32 = arith.constant 0 : i32
    %c0_i32_0 = arith.constant 0 : i32
    %c0_i32_1 = arith.constant 0 : i32
    return %c0_i32, %c0_i32_0 : i32, i32
  }
  func.func @transform_2(%arg0: i32) -> (i32, i32) {
    %c0_i32 = arith.constant 0 : i32
    %c0_i32_0 = arith.constant 0 : i32
    %c0_i32_1 = arith.constant 0 : i32
    return %c0_i32, %c0_i32_0 : i32, i32
  }
  func.func @transform_3(%arg0: i32) -> (i32, i32) {
    %c0_i32 = arith.constant 0 : i32
    %c0_i32_0 = arith.constant 0 : i32
    %c0_i32_1 = arith.constant 0 : i32
    return %c0_i32, %c0_i32_0 : i32, i32
  }
  func.func @transform_4(%arg0: i32) -> (i32, i32) {
    %c0_i32 = arith.constant 0 : i32
    %c0_i32_0 = arith.constant 0 : i32
    %c0_i32_1 = arith.constant 0 : i32
    return %c0_i32, %c0_i32_0 : i32, i32
  }
  func.func @transform_5(%arg0: i32) -> (i32, i32) {
    %c0_i32 = arith.constant 0 : i32
    %c0_i32_0 = arith.constant 0 : i32
    %c0_i32_1 = arith.constant 0 : i32
    return %c0_i32, %c0_i32_0 : i32, i32
  }
  func.func @transform_6(%arg0: i32) -> (i32, i32) {
    %c0_i32 = arith.constant 0 : i32
    %c0_i32_0 = arith.constant 0 : i32
    %c0_i32_1 = arith.constant 0 : i32
    return %c0_i32, %c0_i32_0 : i32, i32
  }
  func.func @transform_7(%arg0: i32) -> (i32, i32, i32) {
    %c0_i32 = arith.constant 0 : i32
    %c0_i32_0 = arith.constant 0 : i32
    %c0_i32_1 = arith.constant 0 : i32
    %c0_i32_2 = arith.constant 0 : i32
    return %c0_i32, %c0_i32_0, %c0_i32_1 : i32, i32, i32
  }
}

</mosaic_0001>

<llo_original>
// kernel: tpu_custom_call.1
$region0: #{tpu_custom_call.1}
  #allocation0 [shape = 'u32[]', space=smem, size = 0x4, offset = 0x4, fixed_abs, tag = 'smem constant byte address 0x4 - core index']
  #allocation1 [shape = 'u32[144,128]{1,0:T(1,128)}', space=vmem, size = 0x12000, scoped, tag = 'internal scratch']
  #allocation2 [shape = 'f32[16,128]{1,0:T(8,128)}', space=vmem, size = 0x2000, scoped, tag = 'scratch operand']
  #allocation3 [shape = 'f32[16,128]{1,0:T(8,128)}', space=vmem, size = 0x2000, scoped, tag = 'scratch operand']
  %s0 = inlined_call_operand.hbm [shape: f32[16,24], index: 0, kind: input, shape index: {}]
  %s1 = inlined_call_operand.hbm [shape: f32[24,128], index: 1, kind: input, shape index: {}]
  %s2 = inlined_call_operand.hbm [shape: f32[32,128], index: 2, kind: input, shape index: {}]
  %s3 = inlined_call_operand.vmem [shape: f32[1,128], index: 3, kind: input, shape index: {}]
  %s4 = inlined_call_operand.hbm [shape: f32[24,128], index: 4, kind: input, shape index: {}]
  %s5 = inlined_call_operand.hbm [shape: f32[32,128], index: 5, kind: input, shape index: {}]
  %s6 = inlined_call_operand.vmem [shape: f32[1,128], index: 6, kind: input, shape index: {}]
  %s7 = inlined_call_operand.hbm [shape: f32[8,2,64], index: 7, kind: output, shape index: {}]
  %s8 = sld [smem:[#allocation0]]
  $region58: #{tpu_custom_call.1} parent=0
    _
  %s10 = ssub.s32 1, %s8
  %s11 = scalar_select 0, %s10, %s8
  $region1: #{tpu_custom_call.1} parent=0
    #allocation4 [shape = 'u8[8192]{0}', space=vmem, size = 0x2000, scoped, tag = 'input window, operand 0, single buffered']
    #allocation5 [shape = 's32[1]{0}', space=sflag, size = 0x4, scoped, tag = 'scoped memory for tpu_custom_call.1']
    #allocation6 [shape = 's32[1]{0}', space=sflag, size = 0x4, scoped, tag = 'scoped memory for tpu_custom_call.1']
    #allocation7 [shape = 'u8[12288]{0}', space=vmem, size = 0x3000, scoped, tag = 'input window, operand 1, single buffered']
    #allocation8 [shape = 's32[1]{0}', space=sflag, size = 0x4, scoped, tag = 'scoped memory for tpu_custom_call.1']
    #allocation9 [shape = 'u8[16384]{0}', space=vmem, size = 0x4000, scoped, tag = 'input window, operand 2, single buffered']
    #allocation10 [shape = 'u8[12288]{0}', space=vmem, size = 0x3000, scoped, tag = 'input window, operand 4, single buffered']
    #allocation11 [shape = 's32[1]{0}', space=sflag, size = 0x4, scoped, tag = 'scoped memory for tpu_custom_call.1']
    #allocation12 [shape = 'u8[16384]{0}', space=vmem, size = 0x4000, scoped, tag = 'input window, operand 5, single buffered']
    #allocation13 [shape = 'u8[8192]{0}', space=vmem, size = 0x2000, scoped, tag = 'output window, operand 0, single buffered']
    %12 = vsyncpa [#allocation5], 0
    %13 = vsyncpa [#allocation8], 0
    %14 = vsyncpa [#allocation11], 0
    %15 = vsyncpa [#allocation6], 0
    // Predicated region
    $region2: #{tpu_custom_call.1} parent=1 // pred_check
      _
    $region3: #{tpu_custom_call.1} parent=1 // pred_check_branch
      %17 = sbr.rel (0) target = $region5
    $region4: #{tpu_custom_call.1} parent=1 // pred_region
      %s19 = ssub.s32 256, 256
      %20 = vsyncadd [#allocation5], %s19
      %s21 = sshll.u32 [#allocation4], 4
      %s22 = int_to_ptr.vmem [resolvable:$true] %s21
      %27 = dma.hbm_to_vmem [thread:$0]  %s0, 256, %s22, [#allocation5], 128, 128, 8
    $region5: #{tpu_custom_call.1} parent=1 // pred_fallthru
      _
    // Predicated region
    $region6: #{tpu_custom_call.1} parent=1 // pred_check
      _
    $region7: #{tpu_custom_call.1} parent=1 // pred_check_branch
      %29 = sbr.rel (0) target = $region9
    $region8: #{tpu_custom_call.1} parent=1 // pred_region
      %s31 = ssub.s32 384, 384
      %32 = vsyncadd [#allocation8], %s31
      %s33 = sshll.u32 [#allocation7], 4
      %s34 = int_to_ptr.vmem [resolvable:$true] %s33
      %39 = dma.hbm_to_vmem [thread:$0]  %s1, 384, %s34, [#allocation8], 128, 128, 8
    $region9: #{tpu_custom_call.1} parent=1 // pred_fallthru
      _
    // Predicated region
    $region10: #{tpu_custom_call.1} parent=1 // pred_check
      _
    $region11: #{tpu_custom_call.1} parent=1 // pred_check_branch
      %41 = sbr.rel (0) target = $region13
    $region12: #{tpu_custom_call.1} parent=1 // pred_region
      %s43 = ssub.s32 512, 512
      %44 = vsyncadd [#allocation8], %s43
      %s45 = sshll.u32 [#allocation9], 4
      %s46 = int_to_ptr.vmem [resolvable:$true] %s45
      %51 = dma.hbm_to_vmem [thread:$0]  %s2, 512, %s46, [#allocation8], 128, 128, 8
    $region13: #{tpu_custom_call.1} parent=1 // pred_fallthru
      _
    // Predicated region
    $region14: #{tpu_custom_call.1} parent=1 // pred_check
      _
    $region15: #{tpu_custom_call.1} parent=1 // pred_check_branch
      %53 = sbr.rel (0) target = $region17
    $region16: #{tpu_custom_call.1} parent=1 // pred_region
      _
    $region17: #{tpu_custom_call.1} parent=1 // pred_fallthru
      _
    // Predicated region
    $region18: #{tpu_custom_call.1} parent=1 // pred_check
      _
    $region19: #{tpu_custom_call.1} parent=1 // pred_check_branch
      %55 = sbr.rel (0) target = $region21
    $region20: #{tpu_custom_call.1} parent=1 // pred_region
      %s57 = ssub.s32 384, 384
      %58 = vsyncadd [#allocation11], %s57
      %s59 = sshll.u32 [#allocation10], 4
      %s60 = int_to_ptr.vmem [resolvable:$true] %s59
      %65 = dma.hbm_to_vmem [thread:$0]  %s4, 384, %s60, [#allocation11], 128, 128, 8
    $region21: #{tpu_custom_call.1} parent=1 // pred_fallthru
      _
    // Predicated region
    $region22: #{tpu_custom_call.1} parent=1 // pred_check
      _
    $region23: #{tpu_custom_call.1} parent=1 // pred_check_branch
      %67 = sbr.rel (0) target = $region25
    $region24: #{tpu_custom_call.1} parent=1 // pred_region
      %s69 = ssub.s32 512, 512
      %70 = vsyncadd [#allocation11], %s69
      %s71 = sshll.u32 [#allocation12], 4
      %s72 = int_to_ptr.vmem [resolvable:$true] %s71
      %77 = dma.hbm_to_vmem [thread:$0]  %s5, 512, %s72, [#allocation11], 128, 128, 8
    $region25: #{tpu_custom_call.1} parent=1 // pred_fallthru
      _
    // Predicated region
    $region26: #{tpu_custom_call.1} parent=1 // pred_check
      _
    $region27: #{tpu_custom_call.1} parent=1 // pred_check_branch
      %79 = sbr.rel (0) target = $region29
    $region28: #{tpu_custom_call.1} parent=1 // pred_region
      _
    $region29: #{tpu_custom_call.1} parent=1 // pred_fallthru
      _
    // Predicated region
    $region30: #{tpu_custom_call.1} parent=1 // pred_check
      _
    $region31: #{tpu_custom_call.1} parent=1 // pred_check_branch
      %81 = sbr.rel (0) target = $region33
    $region32: #{tpu_custom_call.1} parent=1 // pred_region
      %82 = dma.done [#allocation5], 256
    $region33: #{tpu_custom_call.1} parent=1 // pred_fallthru
      _
    // Predicated region
    $region34: #{tpu_custom_call.1} parent=1 // pred_check
      _
    $region35: #{tpu_custom_call.1} parent=1 // pred_check_branch
      %84 = sbr.rel (0) target = $region37
    $region36: #{tpu_custom_call.1} parent=1 // pred_region
      %85 = dma.done [#allocation8], 384
    $region37: #{tpu_custom_call.1} parent=1 // pred_fallthru
      _
    // Predicated region
    $region38: #{tpu_custom_call.1} parent=1 // pred_check
      _
    $region39: #{tpu_custom_call.1} parent=1 // pred_check_branch
      %87 = sbr.rel (0) target = $region41
    $region40: #{tpu_custom_call.1} parent=1 // pred_region
      %88 = dma.done [#allocation8], 512
    $region41: #{tpu_custom_call.1} parent=1 // pred_fallthru
      _
    // Predicated region
    $region42: #{tpu_custom_call.1} parent=1 // pred_check
      _
    $region43: #{tpu_custom_call.1} parent=1 // pred_check_branch
      %90 = sbr.rel (0) target = $region45
    $region44: #{tpu_custom_call.1} parent=1 // pred_region
      %91 = dma.done [#allocation11], 384
    $region45: #{tpu_custom_call.1} parent=1 // pred_fallthru
      _
    // Predicated region
    $region46: #{tpu_custom_call.1} parent=1 // pred_check
      _
    $region47: #{tpu_custom_call.1} parent=1 // pred_check_branch
      %93 = sbr.rel (0) target = $region49
    $region48: #{tpu_custom_call.1} parent=1 // pred_region
      %94 = dma.done [#allocation11], 512
    $region49: #{tpu_custom_call.1} parent=1 // pred_fallthru
      _
    %v95 = vld [vmem:[#allocation4] sm:$0xff]
    %v96 = vld [vmem:[#allocation4 + $0x8] sm:$0xff]
    %v97 = vld [vmem:[#allocation7] sm:$0xff]
    %v98 = vld [vmem:[#allocation7 + $0x8] sm:$0xff]
    %v99 = vld [vmem:[#allocation7 + $0x10] sm:$0xff]
    %v100 = vld [vmem:[%s3] sm:$0x1]
    %v102 = vlaneseq
    %v103 = vshrl.u32 %v102, 7
    %v104 = vsub.s32 0, %v103
    %v105 = vrot.slane %v100, %v104
    %vm107 = vcmask 195584
    %v109 = vsel %vm107, %v95, 0
    %v112 = vsel %vm107, %v96, 0
    %114 = vmatprep.subr.mxu0 0.0
    %115 = vmatpush1.msra.mxu0 0.0
    %116 = vmatprep.subr.mxu0 0.0
    %117 = vmatpush1.msra.mxu0 0.0
    %118 = vmatprep.subr.mxu0 0.0
    %119 = vmatpush1.msra.mxu0 0.0
    %120 = vmatprep.subr.mxu0 0.0
    %121 = vmatpush1.msra.mxu0 0.0
    %122 = vmatprep.subr.mxu0 0.0
    %123 = vmatpush1.msra.mxu0 0.0
    %124 = vmatprep.subr.mxu0 0.0
    %125 = vmatpush1.msra.mxu0 0.0
    %126 = vmatprep.subr.mxu0 0.0
    %127 = vmatpush1.msra.mxu0 0.0
    %128 = vmatprep.subr.mxu0 0.0
    %129 = vmatpush1.msra.mxu0 0.0
    %130 = vmatprep.subr.mxu0 0.0
    %131 = vmatpush1.msra.mxu0 0.0
    %132 = vmatprep.subr.mxu0 0.0
    %133 = vmatpush1.msra.mxu0 0.0
    %134 = vmatprep.subr.mxu0 0.0
    %135 = vmatpush1.msra.mxu0 0.0
    %136 = vmatprep.subr.mxu0 0.0
    %137 = vmatpush1.msra.mxu0 0.0
    %138 = vmatprep.subr.mxu0 0.0
    %139 = vmatpush1.msra.mxu0 0.0
    %140 = vmatprep.subr.mxu0 0.0
    %141 = vmatpush1.msra.mxu0 %v99
    %142 = vmatprep.subr.mxu0 0.0
    %143 = vmatpush1.msra.mxu0 %v98
    %144 = vmatprep.subr.mxu0 0.0
    %145 = vmatpush1.msra.mxu0 %v97
    %146 = vmatprep.subr.mxu0 0.0
    %147 = vmatpush2.msra.mxu0 0.0
    %148 = vmatprep.subr.mxu0 0.0
    %149 = vmatpush2.msra.mxu0 0.0
    %150 = vmatprep.subr.mxu0 0.0
    %151 = vmatpush2.msra.mxu0 0.0
    %152 = vmatprep.subr.mxu0 0.0
    %153 = vmatpush2.msra.mxu0 0.0
    %154 = vmatprep.subr.mxu0 0.0
    %155 = vmatpush2.msra.mxu0 0.0
    %156 = vmatprep.subr.mxu0 0.0
    %157 = vmatpush2.msra.mxu0 0.0
    %158 = vmatprep.subr.mxu0 0.0
    %159 = vmatpush2.msra.mxu0 0.0
    %160 = vmatprep.subr.mxu0 0.0
    %161 = vmatpush2.msra.mxu0 0.0
    %162 = vmatprep.subr.mxu0 0.0
    %163 = vmatpush2.msra.mxu0 0.0
    %164 = vmatprep.subr.mxu0 0.0
    %165 = vmatpush2.msra.mxu0 0.0
    %166 = vmatprep.subr.mxu0 0.0
    %167 = vmatpush2.msra.mxu0 0.0
    %168 = vmatprep.subr.mxu0 0.0
    %169 = vmatpush2.msra.mxu0 0.0
    %170 = vmatprep.subr.mxu0 0.0
    %171 = vmatpush2.msra.mxu0 0.0
    %172 = vmatprep.subr.mxu0 0.0
    %173 = vmatpush2.msra.mxu0 0.0
    %174 = vmatprep.subr.mxu0 0.0
    %175 = vmatpush2.msra.mxu0 0.0
    %176 = vmatprep.subr.mxu0 0.0
    %177 = vmatpush2.msra.mxu0 0.0
    %178 = vmatprep.mubr.f32.mxu0 0.0
    %179 = vmatmul.mubr.f32.gmra.mxu0 %v109
    %v180 = vpop.f32.mrf.mxu0
    %v181 = vadd.f32 %v105, %v180
    %v182 = vpop.f32.mrf.mxu0
    %183 = vmatprep.mubr.f32.mxu0 0.0
    %184 = vmatmul.mubr.f32.gmra.mxu0 %v112
    %v185 = vpop.f32.mrf.mxu0
    %v186 = vadd.f32 %v105, %v185
    %v187 = vpop.f32.mrf.mxu0
    %188 = vdwg.mxu0
    %189 = vst [vmem:[#allocation2] sm:$0xff] %v181
    %190 = vst [vmem:[#allocation2 + $0x8] sm:$0xff] %v186
    %v191 = vld [vmem:[#allocation10] sm:$0xff]
    %v192 = vld [vmem:[#allocation10 + $0x8] sm:$0xff]
    %v193 = vld [vmem:[#allocation10 + $0x10] sm:$0xff]
    %v194 = vld [vmem:[%s6] sm:$0x1]
    %v196 = vlaneseq
    %v197 = vshrl.u32 %v196, 7
    %v198 = vsub.s32 0, %v197
    %v199 = vrot.slane %v194, %v198
    %201 = vmatprep.subr.mxu0 0.0
    %202 = vmatpush1.msra.mxu0 0.0
    %203 = vmatprep.subr.mxu0 0.0
    %204 = vmatpush1.msra.mxu0 0.0
    %205 = vmatprep.subr.mxu0 0.0
    %206 = vmatpush1.msra.mxu0 0.0
    %207 = vmatprep.subr.mxu0 0.0
    %208 = vmatpush1.msra.mxu0 0.0
    %209 = vmatprep.subr.mxu0 0.0
    %210 = vmatpush1.msra.mxu0 0.0
    %211 = vmatprep.subr.mxu0 0.0
    %212 = vmatpush1.msra.mxu0 0.0
    %213 = vmatprep.subr.mxu0 0.0
    %214 = vmatpush1.msra.mxu0 0.0
    %215 = vmatprep.subr.mxu0 0.0
    %216 = vmatpush1.msra.mxu0 0.0
    %217 = vmatprep.subr.mxu0 0.0
    %218 = vmatpush1.msra.mxu0 0.0
    %219 = vmatprep.subr.mxu0 0.0
    %220 = vmatpush1.msra.mxu0 0.0
    %221 = vmatprep.subr.mxu0 0.0
    %222 = vmatpush1.msra.mxu0 0.0
    %223 = vmatprep.subr.mxu0 0.0
    %224 = vmatpush1.msra.mxu0 0.0
    %225 = vmatprep.subr.mxu0 0.0
    %226 = vmatpush1.msra.mxu0 0.0
    %227 = vmatprep.subr.mxu0 0.0
    %228 = vmatpush1.msra.mxu0 %v193
    %229 = vmatprep.subr.mxu0 0.0
    %230 = vmatpush1.msra.mxu0 %v192
    %231 = vmatprep.subr.mxu0 0.0
    %232 = vmatpush1.msra.mxu0 %v191
    %233 = vmatprep.subr.mxu0 0.0
    %234 = vmatpush2.msra.mxu0 0.0
    %235 = vmatprep.subr.mxu0 0.0
    %236 = vmatpush2.msra.mxu0 0.0
    %237 = vmatprep.subr.mxu0 0.0
    %238 = vmatpush2.msra.mxu0 0.0
    %239 = vmatprep.subr.mxu0 0.0
    %240 = vmatpush2.msra.mxu0 0.0
    %241 = vmatprep.subr.mxu0 0.0
    %242 = vmatpush2.msra.mxu0 0.0
    %243 = vmatprep.subr.mxu0 0.0
    %244 = vmatpush2.msra.mxu0 0.0
    %245 = vmatprep.subr.mxu0 0.0
    %246 = vmatpush2.msra.mxu0 0.0
    %247 = vmatprep.subr.mxu0 0.0
    %248 = vmatpush2.msra.mxu0 0.0
    %249 = vmatprep.subr.mxu0 0.0
    %250 = vmatpush2.msra.mxu0 0.0
    %251 = vmatprep.subr.mxu0 0.0
    %252 = vmatpush2.msra.mxu0 0.0
    %253 = vmatprep.subr.mxu0 0.0
    %254 = vmatpush2.msra.mxu0 0.0
    %255 = vmatprep.subr.mxu0 0.0
    %256 = vmatpush2.msra.mxu0 0.0
    %257 = vmatprep.subr.mxu0 0.0
    %258 = vmatpush2.msra.mxu0 0.0
    %259 = vmatprep.subr.mxu0 0.0
    %260 = vmatpush2.msra.mxu0 0.0
    %261 = vmatprep.subr.mxu0 0.0
    %262 = vmatpush2.msra.mxu0 0.0
    %263 = vmatprep.subr.mxu0 0.0
    %264 = vmatpush2.msra.mxu0 0.0
    %265 = vmatprep.mubr.f32.mxu0 0.0
    %266 = vmatmul.mubr.f32.gmra.mxu0 %v109
    %v267 = vpop.f32.mrf.mxu0
    %v268 = vadd.f32 %v199, %v267
    %v269 = vpop.f32.mrf.mxu0
    %270 = vmatprep.mubr.f32.mxu0 0.0
    %271 = vmatmul.mubr.f32.gmra.mxu0 %v112
    %v272 = vpop.f32.mrf.mxu0
    %v273 = vadd.f32 %v199, %v272
    %v274 = vpop.f32.mrf.mxu0
    %275 = vdwg.mxu0
    %276 = vst [vmem:[#allocation3] sm:$0xff] %v268
    %277 = vst [vmem:[#allocation3 + $0x8] sm:$0xff] %v273
    %v278 = vld [vmem:[#allocation9] sm:$0xff]
    %v279 = vld [vmem:[#allocation9 + $0x8] sm:$0xff]
    %v280 = vld [vmem:[#allocation9 + $0x10] sm:$0xff]
    %v281 = vld [vmem:[#allocation9 + $0x18] sm:$0xff]
    %v282 = vld [vmem:[#allocation12] sm:$0xff]
    %v283 = vld [vmem:[#allocation12 + $0x8] sm:$0xff]
    %v284 = vld [vmem:[#allocation12 + $0x10] sm:$0xff]
    %v285 = vld [vmem:[#allocation12 + $0x18] sm:$0xff]
    %v286 = vld [vmem:[#allocation2] sm:$0x3]
    %vm287 = vcmask 261120
    %v289 = vsel %vm287, 0.0, 0
    %291 = vmatprep.subr.mxu0 0.0
    %292 = vmatpush1.msra.mxu0 0.0
    %293 = vmatprep.subr.mxu0 0.0
    %294 = vmatpush1.msra.mxu0 0.0
    %295 = vmatprep.subr.mxu0 0.0
    %296 = vmatpush1.msra.mxu0 0.0
    %297 = vmatprep.subr.mxu0 0.0
    %298 = vmatpush1.msra.mxu0 0.0
    %299 = vmatprep.subr.mxu0 0.0
    %300 = vmatpush1.msra.mxu0 0.0
    %301 = vmatprep.subr.mxu0 0.0
    %302 = vmatpush1.msra.mxu0 0.0
    %303 = vmatprep.subr.mxu0 0.0
    %304 = vmatpush1.msra.mxu0 0.0
    %305 = vmatprep.subr.mxu0 0.0
    %306 = vmatpush1.msra.mxu0 0.0
    %307 = vmatprep.subr.mxu0 0.0
    %308 = vmatpush1.msra.mxu0 0.0
    %309 = vmatprep.subr.mxu0 0.0
    %310 = vmatpush1.msra.mxu0 0.0
    %311 = vmatprep.subr.mxu0 0.0
    %312 = vmatpush1.msra.mxu0 0.0
    %313 = vmatprep.subr.mxu0 0.0
    %314 = vmatpush1.msra.mxu0 0.0
    %315 = vmatprep.subr.mxu0 0.0
    %316 = vmatpush1.msra.mxu0 %v281
    %317 = vmatprep.subr.mxu0 0.0
    %318 = vmatpush1.msra.mxu0 %v280
    %319 = vmatprep.subr.mxu0 0.0
    %320 = vmatpush1.msra.mxu0 %v279
    %321 = vmatprep.subr.mxu0 0.0
    %322 = vmatpush1.msra.mxu0 %v278
    %323 = vmatprep.subr.mxu0 0.0
    %324 = vmatpush2.msra.mxu0 0.0
    %325 = vmatprep.subr.mxu0 0.0
    %326 = vmatpush2.msra.mxu0 0.0
    %327 = vmatprep.subr.mxu0 0.0
    %328 = vmatpush2.msra.mxu0 0.0
    %329 = vmatprep.subr.mxu0 0.0
    %330 = vmatpush2.msra.mxu0 0.0
    %331 = vmatprep.subr.mxu0 0.0
    %332 = vmatpush2.msra.mxu0 0.0
    %333 = vmatprep.subr.mxu0 0.0
    %334 = vmatpush2.msra.mxu0 0.0
    %335 = vmatprep.subr.mxu0 0.0
    %336 = vmatpush2.msra.mxu0 0.0
    %337 = vmatprep.subr.mxu0 0.0
    %338 = vmatpush2.msra.mxu0 0.0
    %339 = vmatprep.subr.mxu0 0.0
    %340 = vmatpush2.msra.mxu0 0.0
    %341 = vmatprep.subr.mxu0 0.0
    %342 = vmatpush2.msra.mxu0 0.0
    %343 = vmatprep.subr.mxu0 0.0
    %344 = vmatpush2.msra.mxu0 0.0
    %345 = vmatprep.subr.mxu0 0.0
    %346 = vmatpush2.msra.mxu0 0.0
    %347 = vmatprep.subr.mxu0 0.0
    %348 = vmatpush2.msra.mxu0 0.0
    %349 = vmatprep.subr.mxu0 0.0
    %350 = vmatpush2.msra.mxu0 0.0
    %351 = vmatprep.subr.mxu0 0.0
    %352 = vmatpush2.msra.mxu0 0.0
    %353 = vmatprep.subr.mxu0 0.0
    %354 = vmatpush2.msra.mxu0 0.0
    %355 = vmatprep.mubr.f32.mxu0 0.0
    %356 = vmatmul.mubr.f32.gmra.mxu0 %v289
    %v357 = vpop.f32.mrf.mxu0
    %v358 = vadd.f32 0.0, %v357
    %v359 = vpop.f32.mrf.mxu0
    %360 = vdwg.mxu0
    %v361 = vadd.f32 %v286, %v358
    %v362 = vxor.u32 %v361, 2147483648
    %v363 = vmul.f32 %v362, 1.442695
    %v364 = vpow.pop %v363
    %v365 = vadd.f32 %v364, 1.0
    %v366 = vrcp.pop %v365
    %v367 = vmul.f32 1.0, %v366
    %v368 = vtanh.pop %v361
    %v369 = vmul.f32 %v367, 0.0
    %371 = vrot.lane.b32.xlu0 %v368, 64
    %v372 = vpop.permute.xlu0 %371
    %v374 = vmul.f32 %v367, %v372
    %376 = vrot.lane.b32.xlu0 %v374, 32
    %v377 = vpop.permute.xlu0 %376
    %v379 = vadd.f32 %v369, %v377
    %v380 = vtanh.pop %v379
    %382 = vrot.lane.b32.xlu0 %v380, 64
    %v383 = vpop.permute.xlu0 %382
    %v385 = vmul.f32 %v367, %v383
    %387 = vrot.lane.b32.xlu0 %v385, 32
    %v388 = vpop.permute.xlu0 %387
    %vm390 = vcmask 254976
    %391 = vst.msk [vmem:[#allocation13] sm:$0x3] %vm390, %v388
    %v392 = vld [vmem:[#allocation3 + $0xe] sm:$0x3]
    %393 = vmatprep.subr.mxu0 0.0
    %394 = vmatpush1.msra.mxu0 0.0
    %395 = vmatprep.subr.mxu0 0.0
    %396 = vmatpush1.msra.mxu0 0.0
    %397 = vmatprep.subr.mxu0 0.0
    %398 = vmatpush1.msra.mxu0 0.0
    %399 = vmatprep.subr.mxu0 0.0
    %400 = vmatpush1.msra.mxu0 0.0
    %401 = vmatprep.subr.mxu0 0.0
    %402 = vmatpush1.msra.mxu0 0.0
    %403 = vmatprep.subr.mxu0 0.0
    %404 = vmatpush1.msra.mxu0 0.0
    %405 = vmatprep.subr.mxu0 0.0
    %406 = vmatpush1.msra.mxu0 0.0
    %407 = vmatprep.subr.mxu0 0.0
    %408 = vmatpush1.msra.mxu0 0.0
    %409 = vmatprep.subr.mxu0 0.0
    %410 = vmatpush1.msra.mxu0 0.0
    %411 = vmatprep.subr.mxu0 0.0
    %412 = vmatpush1.msra.mxu0 0.0
    %413 = vmatprep.subr.mxu0 0.0
    %414 = vmatpush1.msra.mxu0 0.0
    %415 = vmatprep.subr.mxu0 0.0
    %416 = vmatpush1.msra.mxu0 0.0
    %417 = vmatprep.subr.mxu0 0.0
    %418 = vmatpush1.msra.mxu0 %v285
    %419 = vmatprep.subr.mxu0 0.0
    %420 = vmatpush1.msra.mxu0 %v284
    %421 = vmatprep.subr.mxu0 0.0
    %422 = vmatpush1.msra.mxu0 %v283
    %423 = vmatprep.subr.mxu0 0.0
    %424 = vmatpush1.msra.mxu0 %v282
    %425 = vmatprep.subr.mxu0 0.0
    %426 = vmatpush2.msra.mxu0 0.0
    %427 = vmatprep.subr.mxu0 0.0
    %428 = vmatpush2.msra.mxu0 0.0
    %429 = vmatprep.subr.mxu0 0.0
    %430 = vmatpush2.msra.mxu0 0.0
    %431 = vmatprep.subr.mxu0 0.0
    %432 = vmatpush2.msra.mxu0 0.0
    %433 = vmatprep.subr.mxu0 0.0
    %434 = vmatpush2.msra.mxu0 0.0
    %435 = vmatprep.subr.mxu0 0.0
    %436 = vmatpush2.msra.mxu0 0.0
    %437 = vmatprep.subr.mxu0 0.0
    %438 = vmatpush2.msra.mxu0 0.0
    %439 = vmatprep.subr.mxu0 0.0
    %440 = vmatpush2.msra.mxu0 0.0
    %441 = vmatprep.subr.mxu0 0.0
    %442 = vmatpush2.msra.mxu0 0.0
    %443 = vmatprep.subr.mxu0 0.0
    %444 = vmatpush2.msra.mxu0 0.0
    %445 = vmatprep.subr.mxu0 0.0
    %446 = vmatpush2.msra.mxu0 0.0
    %447 = vmatprep.subr.mxu0 0.0
    %448 = vmatpush2.msra.mxu0 0.0
    %449 = vmatprep.subr.mxu0 0.0
    %450 = vmatpush2.msra.mxu0 0.0
    %451 = vmatprep.subr.mxu0 0.0
    %452 = vmatpush2.msra.mxu0 0.0
    %453 = vmatprep.subr.mxu0 0.0
    %454 = vmatpush2.msra.mxu0 0.0
    %455 = vmatprep.subr.mxu0 0.0
    %456 = vmatpush2.msra.mxu0 0.0
    %457 = vmatprep.mubr.f32.mxu0 0.0
    %458 = vmatmul.mubr.f32.gmra.mxu0 %v289
    %v459 = vpop.f32.mrf.mxu0
    %v460 = vadd.f32 0.0, %v459
    %v461 = vpop.f32.mrf.mxu0
    %462 = vdwg.mxu0
    %v463 = vadd.f32 %v392, %v460
    %v464 = vxor.u32 %v463, 2147483648
    %v465 = vmul.f32 %v464, 1.442695
    %v466 = vpow.pop %v465
    %v467 = vadd.f32 %v466, 1.0
    %v468 = vrcp.pop %v467
    %v469 = vmul.f32 1.0, %v468
    %v470 = vtanh.pop %v463
    %v471 = vmul.f32 %v469, 0.0
    %473 = vrot.lane.b32.xlu0 %v470, 64
    %v474 = vpop.permute.xlu0 %473
    %v476 = vmul.f32 %v469, %v474
    %478 = vrot.lane.b32.xlu0 %v476, 32
    %v479 = vpop.permute.xlu0 %478
    %v481 = vadd.f32 %v471, %v479
    %v482 = vtanh.pop %v481
    %484 = vrot.lane.b32.xlu0 %v482, 64
    %v485 = vpop.permute.xlu0 %484
    %v487 = vmul.f32 %v469, %v485
    %489 = vrot.lane.b32.xlu0 %v487, 64
    %v490 = vpop.permute.xlu0 %489
    %s492 = scalar_lea.vmem [#allocation13], 14
    %vm493 = vcmask 517376
    %494 = vst.msk [vmem:[%s492] sm:$0x3] %vm493, %v490
    %v495 = vld [vmem:[#allocation2 + $0x2] sm:$0x3]
    %v496 = vsel %vm287, %v388, 0
    %498 = vmatprep.subr.mxu0 0.0
    %499 = vmatpush1.msra.mxu0 0.0
    %500 = vmatprep.subr.mxu0 0.0
    %501 = vmatpush1.msra.mxu0 0.0
    %502 = vmatprep.subr.mxu0 0.0
    %503 = vmatpush1.msra.mxu0 0.0
    %504 = vmatprep.subr.mxu0 0.0
    %505 = vmatpush1.msra.mxu0 0.0
    %506 = vmatprep.subr.mxu0 0.0
    %507 = vmatpush1.msra.mxu0 0.0
    %508 = vmatprep.subr.mxu0 0.0
    %509 = vmatpush1.msra.mxu0 0.0
    %510 = vmatprep.subr.mxu0 0.0
    %511 = vmatpush1.msra.mxu0 0.0
    %512 = vmatprep.subr.mxu0 0.0
    %513 = vmatpush1.msra.mxu0 0.0
    %514 = vmatprep.subr.mxu0 0.0
    %515 = vmatpush1.msra.mxu0 0.0
    %516 = vmatprep.subr.mxu0 0.0
    %517 = vmatpush1.msra.mxu0 0.0
    %518 = vmatprep.subr.mxu0 0.0
    %519 = vmatpush1.msra.mxu0 0.0
    %520 = vmatprep.subr.mxu0 0.0
    %521 = vmatpush1.msra.mxu0 0.0
    %522 = vmatprep.subr.mxu0 0.0
    %523 = vmatpush1.msra.mxu0 %v281
    %524 = vmatprep.subr.mxu0 0.0
    %525 = vmatpush1.msra.mxu0 %v280
    %526 = vmatprep.subr.mxu0 0.0
    %527 = vmatpush1.msra.mxu0 %v279
    %528 = vmatprep.subr.mxu0 0.0
    %529 = vmatpush1.msra.mxu0 %v278
    %530 = vmatprep.subr.mxu0 0.0
    %531 = vmatpush2.msra.mxu0 0.0
    %532 = vmatprep.subr.mxu0 0.0
    %533 = vmatpush2.msra.mxu0 0.0
    %534 = vmatprep.subr.mxu0 0.0
    %535 = vmatpush2.msra.mxu0 0.0
    %536 = vmatprep.subr.mxu0 0.0
    %537 = vmatpush2.msra.mxu0 0.0
    %538 = vmatprep.subr.mxu0 0.0
    %539 = vmatpush2.msra.mxu0 0.0
    %540 = vmatprep.subr.mxu0 0.0
    %541 = vmatpush2.msra.mxu0 0.0
    %542 = vmatprep.subr.mxu0 0.0
    %543 = vmatpush2.msra.mxu0 0.0
    %544 = vmatprep.subr.mxu0 0.0
    %545 = vmatpush2.msra.mxu0 0.0
    %546 = vmatprep.subr.mxu0 0.0
    %547 = vmatpush2.msra.mxu0 0.0
    %548 = vmatprep.subr.mxu0 0.0
    %549 = vmatpush2.msra.mxu0 0.0
    %550 = vmatprep.subr.mxu0 0.0
    %551 = vmatpush2.msra.mxu0 0.0
    %552 = vmatprep.subr.mxu0 0.0
    %553 = vmatpush2.msra.mxu0 0.0
    %554 = vmatprep.subr.mxu0 0.0
    %555 = vmatpush2.msra.mxu0 0.0
    %556 = vmatprep.subr.mxu0 0.0
    %557 = vmatpush2.msra.mxu0 0.0
    %558 = vmatprep.subr.mxu0 0.0
    %559 = vmatpush2.msra.mxu0 0.0
    %560 = vmatprep.subr.mxu0 0.0
    %561 = vmatpush2.msra.mxu0 0.0
    %562 = vmatprep.mubr.f32.mxu0 0.0
    %563 = vmatmul.mubr.f32.gmra.mxu0 %v496
    %v564 = vpop.f32.mrf.mxu0
    %v565 = vadd.f32 0.0, %v564
    %v566 = vpop.f32.mrf.mxu0
    %567 = vdwg.mxu0
    %v568 = vadd.f32 %v495, %v565
    %v569 = vxor.u32 %v568, 2147483648
    %v570 = vmul.f32 %v569, 1.442695
    %v571 = vpow.pop %v570
    %v572 = vadd.f32 %v571, 1.0
    %v573 = vrcp.pop %v572
    %v574 = vmul.f32 1.0, %v573
    %v575 = vtanh.pop %v568
    %v576 = vmul.f32 %v574, %v379
    %578 = vrot.lane.b32.xlu0 %v575, 64
    %v579 = vpop.permute.xlu0 %578
    %v581 = vmul.f32 %v574, %v579
    %583 = vrot.lane.b32.xlu0 %v581, 32
    %v584 = vpop.permute.xlu0 %583
    %v586 = vadd.f32 %v576, %v584
    %v587 = vtanh.pop %v586
    %589 = vrot.lane.b32.xlu0 %v587, 64
    %v590 = vpop.permute.xlu0 %589
    %v592 = vmul.f32 %v574, %v590
    %594 = vrot.lane.b32.xlu0 %v592, 32
    %v595 = vpop.permute.xlu0 %594
    %s597 = scalar_lea.vmem [#allocation13], 2
    %598 = vst.msk [vmem:[%s597] sm:$0x3] %vm390, %v595
    %v599 = vld [vmem:[#allocation3 + $0xc] sm:$0x3]
    %600 = vrot.lane.b32.xlu0 %v487, 32
    %v601 = vpop.permute.xlu0 %600
    %v602 = vsel %vm287, %v601, 0
    %604 = vmatprep.subr.mxu0 0.0
    %605 = vmatpush1.msra.mxu0 0.0
    %606 = vmatprep.subr.mxu0 0.0
    %607 = vmatpush1.msra.mxu0 0.0
    %608 = vmatprep.subr.mxu0 0.0
    %609 = vmatpush1.msra.mxu0 0.0
    %610 = vmatprep.subr.mxu0 0.0
    %611 = vmatpush1.msra.mxu0 0.0
    %612 = vmatprep.subr.mxu0 0.0
    %613 = vmatpush1.msra.mxu0 0.0
    %614 = vmatprep.subr.mxu0 0.0
    %615 = vmatpush1.msra.mxu0 0.0
    %616 = vmatprep.subr.mxu0 0.0
    %617 = vmatpush1.msra.mxu0 0.0
    %618 = vmatprep.subr.mxu0 0.0
    %619 = vmatpush1.msra.mxu0 0.0
    %620 = vmatprep.subr.mxu0 0.0
    %621 = vmatpush1.msra.mxu0 0.0
    %622 = vmatprep.subr.mxu0 0.0
    %623 = vmatpush1.msra.mxu0 0.0
    %624 = vmatprep.subr.mxu0 0.0
    %625 = vmatpush1.msra.mxu0 0.0
    %626 = vmatprep.subr.mxu0 0.0
    %627 = vmatpush1.msra.mxu0 0.0
    %628 = vmatprep.subr.mxu0 0.0
    %629 = vmatpush1.msra.mxu0 %v285
    %630 = vmatprep.subr.mxu0 0.0
    %631 = vmatpush1.msra.mxu0 %v284
    %632 = vmatprep.subr.mxu0 0.0
    %633 = vmatpush1.msra.mxu0 %v283
    %634 = vmatprep.subr.mxu0 0.0
    %635 = vmatpush1.msra.mxu0 %v282
    %636 = vmatprep.subr.mxu0 0.0
    %637 = vmatpush2.msra.mxu0 0.0
    %638 = vmatprep.subr.mxu0 0.0
    %639 = vmatpush2.msra.mxu0 0.0
    %640 = vmatprep.subr.mxu0 0.0
    %641 = vmatpush2.msra.mxu0 0.0
    %642 = vmatprep.subr.mxu0 0.0
    %643 = vmatpush2.msra.mxu0 0.0
    %644 = vmatprep.subr.mxu0 0.0
    %645 = vmatpush2.msra.mxu0 0.0
    %646 = vmatprep.subr.mxu0 0.0
    %647 = vmatpush2.msra.mxu0 0.0
    %648 = vmatprep.subr.mxu0 0.0
    %649 = vmatpush2.msra.mxu0 0.0
    %650 = vmatprep.subr.mxu0 0.0
    %651 = vmatpush2.msra.mxu0 0.0
    %652 = vmatprep.subr.mxu0 0.0
    %653 = vmatpush2.msra.mxu0 0.0
    %654 = vmatprep.subr.mxu0 0.0
    %655 = vmatpush2.msra.mxu0 0.0
    %656 = vmatprep.subr.mxu0 0.0
    %657 = vmatpush2.msra.mxu0 0.0
    %658 = vmatprep.subr.mxu0 0.0
    %659 = vmatpush2.msra.mxu0 0.0
    %660 = vmatprep.subr.mxu0 0.0
    %661 = vmatpush2.msra.mxu0 0.0
    %662 = vmatprep.subr.mxu0 0.0
    %663 = vmatpush2.msra.mxu0 0.0
    %664 = vmatprep.subr.mxu0 0.0
    %665 = vmatpush2.msra.mxu0 0.0
    %666 = vmatprep.subr.mxu0 0.0
    %667 = vmatpush2.msra.mxu0 0.0
    %668 = vmatprep.mubr.f32.mxu0 0.0
    %669 = vmatmul.mubr.f32.gmra.mxu0 %v602
    %v670 = vpop.f32.mrf.mxu0
    %v671 = vadd.f32 0.0, %v670
    %v672 = vpop.f32.mrf.mxu0
    %673 = vdwg.mxu0
    %v674 = vadd.f32 %v599, %v671
    %v675 = vxor.u32 %v674, 2147483648
    %v676 = vmul.f32 %v675, 1.442695
    %v677 = vpow.pop %v676
    %v678 = vadd.f32 %v677, 1.0
    %v679 = vrcp.pop %v678
    %v680 = vmul.f32 1.0, %v679
    %v681 = vtanh.pop %v674
    %v682 = vmul.f32 %v680, %v481
    %684 = vrot.lane.b32.xlu0 %v681, 64
    %v685 = vpop.permute.xlu0 %684
    %v687 = vmul.f32 %v680, %v685
    %689 = vrot.lane.b32.xlu0 %v687, 32
    %v690 = vpop.permute.xlu0 %689
    %v692 = vadd.f32 %v682, %v690
    %v693 = vtanh.pop %v692
    %695 = vrot.lane.b32.xlu0 %v693, 64
    %v696 = vpop.permute.xlu0 %695
    %v698 = vmul.f32 %v680, %v696
    %700 = vrot.lane.b32.xlu0 %v698, 64
    %v701 = vpop.permute.xlu0 %700
    %s703 = scalar_lea.vmem [#allocation13], 12
    %704 = vst.msk [vmem:[%s703] sm:$0x3] %vm493, %v701
    %v705 = vld [vmem:[#allocation2 + $0x4] sm:$0x3]
    %v706 = vsel %vm287, %v595, 0
    %708 = vmatprep.subr.mxu0 0.0
    %709 = vmatpush1.msra.mxu0 0.0
    %710 = vmatprep.subr.mxu0 0.0
    %711 = vmatpush1.msra.mxu0 0.0
    %712 = vmatprep.subr.mxu0 0.0
    %713 = vmatpush1.msra.mxu0 0.0
    %714 = vmatprep.subr.mxu0 0.0
    %715 = vmatpush1.msra.mxu0 0.0
    %716 = vmatprep.subr.mxu0 0.0
    %717 = vmatpush1.msra.mxu0 0.0
    %718 = vmatprep.subr.mxu0 0.0
    %719 = vmatpush1.msra.mxu0 0.0
    %720 = vmatprep.subr.mxu0 0.0
    %721 = vmatpush1.msra.mxu0 0.0
    %722 = vmatprep.subr.mxu0 0.0
    %723 = vmatpush1.msra.mxu0 0.0
    %724 = vmatprep.subr.mxu0 0.0
    %725 = vmatpush1.msra.mxu0 0.0
    %726 = vmatprep.subr.mxu0 0.0
    %727 = vmatpush1.msra.mxu0 0.0
    %728 = vmatprep.subr.mxu0 0.0
    %729 = vmatpush1.msra.mxu0 0.0
    %730 = vmatprep.subr.mxu0 0.0
    %731 = vmatpush1.msra.mxu0 0.0
    %732 = vmatprep.subr.mxu0 0.0
    %733 = vmatpush1.msra.mxu0 %v281
    %734 = vmatprep.subr.mxu0 0.0
    %735 = vmatpush1.msra.mxu0 %v280
    %736 = vmatprep.subr.mxu0 0.0
    %737 = vmatpush1.msra.mxu0 %v279
    %738 = vmatprep.subr.mxu0 0.0
    %739 = vmatpush1.msra.mxu0 %v278
    %740 = vmatprep.subr.mxu0 0.0
    %741 = vmatpush2.msra.mxu0 0.0
    %742 = vmatprep.subr.mxu0 0.0
    %743 = vmatpush2.msra.mxu0 0.0
    %744 = vmatprep.subr.mxu0 0.0
    %745 = vmatpush2.msra.mxu0 0.0
    %746 = vmatprep.subr.mxu0 0.0
    %747 = vmatpush2.msra.mxu0 0.0
    %748 = vmatprep.subr.mxu0 0.0
    %749 = vmatpush2.msra.mxu0 0.0
    %750 = vmatprep.subr.mxu0 0.0
    %751 = vmatpush2.msra.mxu0 0.0
    %752 = vmatprep.subr.mxu0 0.0
    %753 = vmatpush2.msra.mxu0 0.0
    %754 = vmatprep.subr.mxu0 0.0
    %755 = vmatpush2.msra.mxu0 0.0
    %756 = vmatprep.subr.mxu0 0.0
    %757 = vmatpush2.msra.mxu0 0.0
    %758 = vmatprep.subr.mxu0 0.0
    %759 = vmatpush2.msra.mxu0 0.0
    %760 = vmatprep.subr.mxu0 0.0
    %761 = vmatpush2.msra.mxu0 0.0
    %762 = vmatprep.subr.mxu0 0.0
    %763 = vmatpush2.msra.mxu0 0.0
    %764 = vmatprep.subr.mxu0 0.0
    %765 = vmatpush2.msra.mxu0 0.0
    %766 = vmatprep.subr.mxu0 0.0
    %767 = vmatpush2.msra.mxu0 0.0
    %768 = vmatprep.subr.mxu0 0.0
    %769 = vmatpush2.msra.mxu0 0.0
    %770 = vmatprep.subr.mxu0 0.0
    %771 = vmatpush2.msra.mxu0 0.0
    %772 = vmatprep.mubr.f32.mxu0 0.0
    %773 = vmatmul.mubr.f32.gmra.mxu0 %v706
    %v774 = vpop.f32.mrf.mxu0
    %v775 = vadd.f32 0.0, %v774
    %v776 = vpop.f32.mrf.mxu0
    %777 = vdwg.mxu0
    %v778 = vadd.f32 %v705, %v775
    %v779 = vxor.u32 %v778, 2147483648
    %v780 = vmul.f32 %v779, 1.442695
    %v781 = vpow.pop %v780
    %v782 = vadd.f32 %v781, 1.0
    %v783 = vrcp.pop %v782
    %v784 = vmul.f32 1.0, %v783
    %v785 = vtanh.pop %v778
    %v786 = vmul.f32 %v784, %v586
    %788 = vrot.lane.b32.xlu0 %v785, 64
    %v789 = vpop.permute.xlu0 %788
    %v791 = vmul.f32 %v784, %v789
    %793 = vrot.lane.b32.xlu0 %v791, 32
    %v794 = vpop.permute.xlu0 %793
    %v796 = vadd.f32 %v786, %v794
    %v797 = vtanh.pop %v796
    %799 = vrot.lane.b32.xlu0 %v797, 64
    %v800 = vpop.permute.xlu0 %799
    %v802 = vmul.f32 %v784, %v800
    %804 = vrot.lane.b32.xlu0 %v802, 32
    %v805 = vpop.permute.xlu0 %804
    %s807 = scalar_lea.vmem [#allocation13], 4
    %808 = vst.msk [vmem:[%s807] sm:$0x3] %vm390, %v805
    %v809 = vld [vmem:[#allocation3 + $0xa] sm:$0x3]
    %810 = vrot.lane.b32.xlu0 %v698, 32
    %v811 = vpop.permute.xlu0 %810
    %v812 = vsel %vm287, %v811, 0
    %814 = vmatprep.subr.mxu0 0.0
    %815 = vmatpush1.msra.mxu0 0.0
    %816 = vmatprep.subr.mxu0 0.0
    %817 = vmatpush1.msra.mxu0 0.0
    %818 = vmatprep.subr.mxu0 0.0
    %819 = vmatpush1.msra.mxu0 0.0
    %820 = vmatprep.subr.mxu0 0.0
    %821 = vmatpush1.msra.mxu0 0.0
    %822 = vmatprep.subr.mxu0 0.0
    %823 = vmatpush1.msra.mxu0 0.0
    %824 = vmatprep.subr.mxu0 0.0
    %825 = vmatpush1.msra.mxu0 0.0
    %826 = vmatprep.subr.mxu0 0.0
    %827 = vmatpush1.msra.mxu0 0.0
    %828 = vmatprep.subr.mxu0 0.0
    %829 = vmatpush1.msra.mxu0 0.0
    %830 = vmatprep.subr.mxu0 0.0
    %831 = vmatpush1.msra.mxu0 0.0
    %832 = vmatprep.subr.mxu0 0.0
    %833 = vmatpush1.msra.mxu0 0.0
    %834 = vmatprep.subr.mxu0 0.0
    %835 = vmatpush1.msra.mxu0 0.0
    %836 = vmatprep.subr.mxu0 0.0
    %837 = vmatpush1.msra.mxu0 0.0
    %838 = vmatprep.subr.mxu0 0.0
    %839 = vmatpush1.msra.mxu0 %v285
    %840 = vmatprep.subr.mxu0 0.0
    %841 = vmatpush1.msra.mxu0 %v284
    %842 = vmatprep.subr.mxu0 0.0
    %843 = vmatpush1.msra.mxu0 %v283
    %844 = vmatprep.subr.mxu0 0.0
    %845 = vmatpush1.msra.mxu0 %v282
    %846 = vmatprep.subr.mxu0 0.0
    %847 = vmatpush2.msra.mxu0 0.0
    %848 = vmatprep.subr.mxu0 0.0
    %849 = vmatpush2.msra.mxu0 0.0
    %850 = vmatprep.subr.mxu0 0.0
    %851 = vmatpush2.msra.mxu0 0.0
    %852 = vmatprep.subr.mxu0 0.0
    %853 = vmatpush2.msra.mxu0 0.0
    %854 = vmatprep.subr.mxu0 0.0
    %855 = vmatpush2.msra.mxu0 0.0
    %856 = vmatprep.subr.mxu0 0.0
    %857 = vmatpush2.msra.mxu0 0.0
    %858 = vmatprep.subr.mxu0 0.0
    %859 = vmatpush2.msra.mxu0 0.0
    %860 = vmatprep.subr.mxu0 0.0
    %861 = vmatpush2.msra.mxu0 0.0
    %862 = vmatprep.subr.mxu0 0.0
    %863 = vmatpush2.msra.mxu0 0.0
    %864 = vmatprep.subr.mxu0 0.0
    %865 = vmatpush2.msra.mxu0 0.0
    %866 = vmatprep.subr.mxu0 0.0
    %867 = vmatpush2.msra.mxu0 0.0
    %868 = vmatprep.subr.mxu0 0.0
    %869 = vmatpush2.msra.mxu0 0.0
    %870 = vmatprep.subr.mxu0 0.0
    %871 = vmatpush2.msra.mxu0 0.0
    %872 = vmatprep.subr.mxu0 0.0
    %873 = vmatpush2.msra.mxu0 0.0
    %874 = vmatprep.subr.mxu0 0.0
    %875 = vmatpush2.msra.mxu0 0.0
    %876 = vmatprep.subr.mxu0 0.0
    %877 = vmatpush2.msra.mxu0 0.0
    %878 = vmatprep.mubr.f32.mxu0 0.0
    %879 = vmatmul.mubr.f32.gmra.mxu0 %v812
    %v880 = vpop.f32.mrf.mxu0
    %v881 = vadd.f32 0.0, %v880
    %v882 = vpop.f32.mrf.mxu0
    %883 = vdwg.mxu0
    %v884 = vadd.f32 %v809, %v881
    %v885 = vxor.u32 %v884, 2147483648
    %v886 = vmul.f32 %v885, 1.442695
    %v887 = vpow.pop %v886
    %v888 = vadd.f32 %v887, 1.0
    %v889 = vrcp.pop %v888
    %v890 = vmul.f32 1.0, %v889
    %v891 = vtanh.pop %v884
    %v892 = vmul.f32 %v890, %v692
    %894 = vrot.lane.b32.xlu0 %v891, 64
    %v895 = vpop.permute.xlu0 %894
    %v897 = vmul.f32 %v890, %v895
    %899 = vrot.lane.b32.xlu0 %v897, 32
    %v900 = vpop.permute.xlu0 %899
    %v902 = vadd.f32 %v892, %v900
    %v903 = vtanh.pop %v902
    %905 = vrot.lane.b32.xlu0 %v903, 64
    %v906 = vpop.permute.xlu0 %905
    %v908 = vmul.f32 %v890, %v906
    %910 = vrot.lane.b32.xlu0 %v908, 64
    %v911 = vpop.permute.xlu0 %910
    %s913 = scalar_lea.vmem [#allocation13], 10
    %914 = vst.msk [vmem:[%s913] sm:$0x3] %vm493, %v911
    %v915 = vld [vmem:[#allocation2 + $0x6] sm:$0x3]
    %v916 = vsel %vm287, %v805, 0
    %918 = vmatprep.subr.mxu0 0.0
    %919 = vmatpush1.msra.mxu0 0.0
    %920 = vmatprep.subr.mxu0 0.0
    %921 = vmatpush1.msra.mxu0 0.0
    %922 = vmatprep.subr.mxu0 0.0
    %923 = vmatpush1.msra.mxu0 0.0
    %924 = vmatprep.subr.mxu0 0.0
    %925 = vmatpush1.msra.mxu0 0.0
    %926 = vmatprep.subr.mxu0 0.0
    %927 = vmatpush1.msra.mxu0 0.0
    %928 = vmatprep.subr.mxu0 0.0
    %929 = vmatpush1.msra.mxu0 0.0
    %930 = vmatprep.subr.mxu0 0.0
    %931 = vmatpush1.msra.mxu0 0.0
    %932 = vmatprep.subr.mxu0 0.0
    %933 = vmatpush1.msra.mxu0 0.0
    %934 = vmatprep.subr.mxu0 0.0
    %935 = vmatpush1.msra.mxu0 0.0
    %936 = vmatprep.subr.mxu0 0.0
    %937 = vmatpush1.msra.mxu0 0.0
    %938 = vmatprep.subr.mxu0 0.0
    %939 = vmatpush1.msra.mxu0 0.0
    %940 = vmatprep.subr.mxu0 0.0
    %941 = vmatpush1.msra.mxu0 0.0
    %942 = vmatprep.subr.mxu0 0.0
    %943 = vmatpush1.msra.mxu0 %v281
    %944 = vmatprep.subr.mxu0 0.0
    %945 = vmatpush1.msra.mxu0 %v280
    %946 = vmatprep.subr.mxu0 0.0
    %947 = vmatpush1.msra.mxu0 %v279
    %948 = vmatprep.subr.mxu0 0.0
    %949 = vmatpush1.msra.mxu0 %v278
    %950 = vmatprep.subr.mxu0 0.0
    %951 = vmatpush2.msra.mxu0 0.0
    %952 = vmatprep.subr.mxu0 0.0
    %953 = vmatpush2.msra.mxu0 0.0
    %954 = vmatprep.subr.mxu0 0.0
    %955 = vmatpush2.msra.mxu0 0.0
    %956 = vmatprep.subr.mxu0 0.0
    %957 = vmatpush2.msra.mxu0 0.0
    %958 = vmatprep.subr.mxu0 0.0
    %959 = vmatpush2.msra.mxu0 0.0
    %960 = vmatprep.subr.mxu0 0.0
    %961 = vmatpush2.msra.mxu0 0.0
    %962 = vmatprep.subr.mxu0 0.0
    %963 = vmatpush2.msra.mxu0 0.0
    %964 = vmatprep.subr.mxu0 0.0
    %965 = vmatpush2.msra.mxu0 0.0
    %966 = vmatprep.subr.mxu0 0.0
    %967 = vmatpush2.msra.mxu0 0.0
    %968 = vmatprep.subr.mxu0 0.0
    %969 = vmatpush2.msra.mxu0 0.0
    %970 = vmatprep.subr.mxu0 0.0
    %971 = vmatpush2.msra.mxu0 0.0
    %972 = vmatprep.subr.mxu0 0.0
    %973 = vmatpush2.msra.mxu0 0.0
    %974 = vmatprep.subr.mxu0 0.0
    %975 = vmatpush2.msra.mxu0 0.0
    %976 = vmatprep.subr.mxu0 0.0
    %977 = vmatpush2.msra.mxu0 0.0
    %978 = vmatprep.subr.mxu0 0.0
    %979 = vmatpush2.msra.mxu0 0.0
    %980 = vmatprep.subr.mxu0 0.0
    %981 = vmatpush2.msra.mxu0 0.0
    %982 = vmatprep.mubr.f32.mxu0 0.0
    %983 = vmatmul.mubr.f32.gmra.mxu0 %v916
    %v984 = vpop.f32.mrf.mxu0
    %v985 = vadd.f32 0.0, %v984
    %v986 = vpop.f32.mrf.mxu0
    %987 = vdwg.mxu0
    %v988 = vadd.f32 %v915, %v985
    %v989 = vxor.u32 %v988, 2147483648
    %v990 = vmul.f32 %v989, 1.442695
    %v991 = vpow.pop %v990
    %v992 = vadd.f32 %v991, 1.0
    %v993 = vrcp.pop %v992
    %v994 = vmul.f32 1.0, %v993
    %v995 = vtanh.pop %v988
    %v996 = vmul.f32 %v994, %v796
    %998 = vrot.lane.b32.xlu0 %v995, 64
    %v999 = vpop.permute.xlu0 %998
    %v1001 = vmul.f32 %v994, %v999
    %1003 = vrot.lane.b32.xlu0 %v1001, 32
    %v1004 = vpop.permute.xlu0 %1003
    %v1006 = vadd.f32 %v996, %v1004
    %v1007 = vtanh.pop %v1006
    %1009 = vrot.lane.b32.xlu0 %v1007, 64
    %v1010 = vpop.permute.xlu0 %1009
    %v1012 = vmul.f32 %v994, %v1010
    %1014 = vrot.lane.b32.xlu0 %v1012, 32
    %v1015 = vpop.permute.xlu0 %1014
    %s1017 = scalar_lea.vmem [#allocation13], 6
    %1018 = vst.msk [vmem:[%s1017] sm:$0x3] %vm390, %v1015
    %v1019 = vld [vmem:[#allocation3 + $0x8] sm:$0x3]
    %1020 = vrot.lane.b32.xlu0 %v908, 32
    %v1021 = vpop.permute.xlu0 %1020
    %v1022 = vsel %vm287, %v1021, 0
    %1024 = vmatprep.subr.mxu0 0.0
    %1025 = vmatpush1.msra.mxu0 0.0
    %1026 = vmatprep.subr.mxu0 0.0
    %1027 = vmatpush1.msra.mxu0 0.0
    %1028 = vmatprep.subr.mxu0 0.0
    %1029 = vmatpush1.msra.mxu0 0.0
    %1030 = vmatprep.subr.mxu0 0.0
    %1031 = vmatpush1.msra.mxu0 0.0
    %1032 = vmatprep.subr.mxu0 0.0
    %1033 = vmatpush1.msra.mxu0 0.0
    %1034 = vmatprep.subr.mxu0 0.0
    %1035 = vmatpush1.msra.mxu0 0.0
    %1036 = vmatprep.subr.mxu0 0.0
    %1037 = vmatpush1.msra.mxu0 0.0
    %1038 = vmatprep.subr.mxu0 0.0
    %1039 = vmatpush1.msra.mxu0 0.0
    %1040 = vmatprep.subr.mxu0 0.0
    %1041 = vmatpush1.msra.mxu0 0.0
    %1042 = vmatprep.subr.mxu0 0.0
    %1043 = vmatpush1.msra.mxu0 0.0
    %1044 = vmatprep.subr.mxu0 0.0
    %1045 = vmatpush1.msra.mxu0 0.0
    %1046 = vmatprep.subr.mxu0 0.0
    %1047 = vmatpush1.msra.mxu0 0.0
    %1048 = vmatprep.subr.mxu0 0.0
    %1049 = vmatpush1.msra.mxu0 %v285
    %1050 = vmatprep.subr.mxu0 0.0
    %1051 = vmatpush1.msra.mxu0 %v284
    %1052 = vmatprep.subr.mxu0 0.0
    %1053 = vmatpush1.msra.mxu0 %v283
    %1054 = vmatprep.subr.mxu0 0.0
    %1055 = vmatpush1.msra.mxu0 %v282
    %1056 = vmatprep.subr.mxu0 0.0
    %1057 = vmatpush2.msra.mxu0 0.0
    %1058 = vmatprep.subr.mxu0 0.0
    %1059 = vmatpush2.msra.mxu0 0.0
    %1060 = vmatprep.subr.mxu0 0.0
    %1061 = vmatpush2.msra.mxu0 0.0
    %1062 = vmatprep.subr.mxu0 0.0
    %1063 = vmatpush2.msra.mxu0 0.0
    %1064 = vmatprep.subr.mxu0 0.0
    %1065 = vmatpush2.msra.mxu0 0.0
    %1066 = vmatprep.subr.mxu0 0.0
    %1067 = vmatpush2.msra.mxu0 0.0
    %1068 = vmatprep.subr.mxu0 0.0
    %1069 = vmatpush2.msra.mxu0 0.0
    %1070 = vmatprep.subr.mxu0 0.0
    %1071 = vmatpush2.msra.mxu0 0.0
    %1072 = vmatprep.subr.mxu0 0.0
    %1073 = vmatpush2.msra.mxu0 0.0
    %1074 = vmatprep.subr.mxu0 0.0
    %1075 = vmatpush2.msra.mxu0 0.0
    %1076 = vmatprep.subr.mxu0 0.0
    %1077 = vmatpush2.msra.mxu0 0.0
    %1078 = vmatprep.subr.mxu0 0.0
    %1079 = vmatpush2.msra.mxu0 0.0
    %1080 = vmatprep.subr.mxu0 0.0
    %1081 = vmatpush2.msra.mxu0 0.0
    %1082 = vmatprep.subr.mxu0 0.0
    %1083 = vmatpush2.msra.mxu0 0.0
    %1084 = vmatprep.subr.mxu0 0.0
    %1085 = vmatpush2.msra.mxu0 0.0
    %1086 = vmatprep.subr.mxu0 0.0
    %1087 = vmatpush2.msra.mxu0 0.0
    %1088 = vmatprep.mubr.f32.mxu0 0.0
    %1089 = vmatmul.mubr.f32.gmra.mxu0 %v1022
    %v1090 = vpop.f32.mrf.mxu0
    %v1091 = vadd.f32 0.0, %v1090
    %v1092 = vpop.f32.mrf.mxu0
    %1093 = vdwg.mxu0
    %v1094 = vadd.f32 %v1019, %v1091
    %v1095 = vxor.u32 %v1094, 2147483648
    %v1096 = vmul.f32 %v1095, 1.442695
    %v1097 = vpow.pop %v1096
    %v1098 = vadd.f32 %v1097, 1.0
    %v1099 = vrcp.pop %v1098
    %v1100 = vmul.f32 1.0, %v1099
    %v1101 = vtanh.pop %v1094
    %v1102 = vmul.f32 %v1100, %v902
    %1104 = vrot.lane.b32.xlu0 %v1101, 64
    %v1105 = vpop.permute.xlu0 %1104
    %v1107 = vmul.f32 %v1100, %v1105
    %1109 = vrot.lane.b32.xlu0 %v1107, 32
    %v1110 = vpop.permute.xlu0 %1109
    %v1112 = vadd.f32 %v1102, %v1110
    %v1113 = vtanh.pop %v1112
    %1115 = vrot.lane.b32.xlu0 %v1113, 64
    %v1116 = vpop.permute.xlu0 %1115
    %v1118 = vmul.f32 %v1100, %v1116
    %1120 = vrot.lane.b32.xlu0 %v1118, 64
    %v1121 = vpop.permute.xlu0 %1120
    %s1123 = scalar_lea.vmem [#allocation13], 8
    %1124 = vst.msk [vmem:[%s1123] sm:$0x3] %vm493, %v1121
    %v1125 = vld [vmem:[#allocation2 + $0x8] sm:$0x3]
    %v1126 = vsel %vm287, %v1015, 0
    %1128 = vmatprep.subr.mxu0 0.0
    %1129 = vmatpush1.msra.mxu0 0.0
    %1130 = vmatprep.subr.mxu0 0.0
    %1131 = vmatpush1.msra.mxu0 0.0
    %1132 = vmatprep.subr.mxu0 0.0
    %1133 = vmatpush1.msra.mxu0 0.0
    %1134 = vmatprep.subr.mxu0 0.0
    %1135 = vmatpush1.msra.mxu0 0.0
    %1136 = vmatprep.subr.mxu0 0.0
    %1137 = vmatpush1.msra.mxu0 0.0
    %1138 = vmatprep.subr.mxu0 0.0
    %1139 = vmatpush1.msra.mxu0 0.0
    %1140 = vmatprep.subr.mxu0 0.0
    %1141 = vmatpush1.msra.mxu0 0.0
    %1142 = vmatprep.subr.mxu0 0.0
    %1143 = vmatpush1.msra.mxu0 0.0
    %1144 = vmatprep.subr.mxu0 0.0
    %1145 = vmatpush1.msra.mxu0 0.0
    %1146 = vmatprep.subr.mxu0 0.0
    %1147 = vmatpush1.msra.mxu0 0.0
    %1148 = vmatprep.subr.mxu0 0.0
    %1149 = vmatpush1.msra.mxu0 0.0
    %1150 = vmatprep.subr.mxu0 0.0
    %1151 = vmatpush1.msra.mxu0 0.0
    %1152 = vmatprep.subr.mxu0 0.0
    %1153 = vmatpush1.msra.mxu0 %v281
    %1154 = vmatprep.subr.mxu0 0.0
    %1155 = vmatpush1.msra.mxu0 %v280
    %1156 = vmatprep.subr.mxu0 0.0
    %1157 = vmatpush1.msra.mxu0 %v279
    %1158 = vmatprep.subr.mxu0 0.0
    %1159 = vmatpush1.msra.mxu0 %v278
    %1160 = vmatprep.subr.mxu0 0.0
    %1161 = vmatpush2.msra.mxu0 0.0
    %1162 = vmatprep.subr.mxu0 0.0
    %1163 = vmatpush2.msra.mxu0 0.0
    %1164 = vmatprep.subr.mxu0 0.0
    %1165 = vmatpush2.msra.mxu0 0.0
    %1166 = vmatprep.subr.mxu0 0.0
    %1167 = vmatpush2.msra.mxu0 0.0
    %1168 = vmatprep.subr.mxu0 0.0
    %1169 = vmatpush2.msra.mxu0 0.0
    %1170 = vmatprep.subr.mxu0 0.0
    %1171 = vmatpush2.msra.mxu0 0.0
    %1172 = vmatprep.subr.mxu0 0.0
    %1173 = vmatpush2.msra.mxu0 0.0
    %1174 = vmatprep.subr.mxu0 0.0
    %1175 = vmatpush2.msra.mxu0 0.0
    %1176 = vmatprep.subr.mxu0 0.0
    %1177 = vmatpush2.msra.mxu0 0.0
    %1178 = vmatprep.subr.mxu0 0.0
    %1179 = vmatpush2.msra.mxu0 0.0
    %1180 = vmatprep.subr.mxu0 0.0
    %1181 = vmatpush2.msra.mxu0 0.0
    %1182 = vmatprep.subr.mxu0 0.0
    %1183 = vmatpush2.msra.mxu0 0.0
    %1184 = vmatprep.subr.mxu0 0.0
    %1185 = vmatpush2.msra.mxu0 0.0
    %1186 = vmatprep.subr.mxu0 0.0
    %1187 = vmatpush2.msra.mxu0 0.0
    %1188 = vmatprep.subr.mxu0 0.0
    %1189 = vmatpush2.msra.mxu0 0.0
    %1190 = vmatprep.subr.mxu0 0.0
    %1191 = vmatpush2.msra.mxu0 0.0
    %1192 = vmatprep.mubr.f32.mxu0 0.0
    %1193 = vmatmul.mubr.f32.gmra.mxu0 %v1126
    %v1194 = vpop.f32.mrf.mxu0
    %v1195 = vadd.f32 0.0, %v1194
    %v1196 = vpop.f32.mrf.mxu0
    %1197 = vdwg.mxu0
    %v1198 = vadd.f32 %v1125, %v1195
    %v1199 = vxor.u32 %v1198, 2147483648
    %v1200 = vmul.f32 %v1199, 1.442695
    %v1201 = vpow.pop %v1200
    %v1202 = vadd.f32 %v1201, 1.0
    %v1203 = vrcp.pop %v1202
    %v1204 = vmul.f32 1.0, %v1203
    %v1205 = vtanh.pop %v1198
    %v1206 = vmul.f32 %v1204, %v1006
    %1208 = vrot.lane.b32.xlu0 %v1205, 64
    %v1209 = vpop.permute.xlu0 %1208
    %v1211 = vmul.f32 %v1204, %v1209
    %1213 = vrot.lane.b32.xlu0 %v1211, 32
    %v1214 = vpop.permute.xlu0 %1213
    %v1216 = vadd.f32 %v1206, %v1214
    %v1217 = vtanh.pop %v1216
    %1219 = vrot.lane.b32.xlu0 %v1217, 64
    %v1220 = vpop.permute.xlu0 %1219
    %v1222 = vmul.f32 %v1204, %v1220
    %1224 = vrot.lane.b32.xlu0 %v1222, 32
    %v1225 = vpop.permute.xlu0 %1224
    %1227 = vst.msk [vmem:[%s1123] sm:$0x3] %vm390, %v1225
    %v1228 = vld [vmem:[#allocation3 + $0x6] sm:$0x3]
    %1229 = vrot.lane.b32.xlu0 %v1118, 32
    %v1230 = vpop.permute.xlu0 %1229
    %v1231 = vsel %vm287, %v1230, 0
    %1233 = vmatprep.subr.mxu0 0.0
    %1234 = vmatpush1.msra.mxu0 0.0
    %1235 = vmatprep.subr.mxu0 0.0
    %1236 = vmatpush1.msra.mxu0 0.0
    %1237 = vmatprep.subr.mxu0 0.0
    %1238 = vmatpush1.msra.mxu0 0.0
    %1239 = vmatprep.subr.mxu0 0.0
    %1240 = vmatpush1.msra.mxu0 0.0
    %1241 = vmatprep.subr.mxu0 0.0
    %1242 = vmatpush1.msra.mxu0 0.0
    %1243 = vmatprep.subr.mxu0 0.0
    %1244 = vmatpush1.msra.mxu0 0.0
    %1245 = vmatprep.subr.mxu0 0.0
    %1246 = vmatpush1.msra.mxu0 0.0
    %1247 = vmatprep.subr.mxu0 0.0
    %1248 = vmatpush1.msra.mxu0 0.0
    %1249 = vmatprep.subr.mxu0 0.0
    %1250 = vmatpush1.msra.mxu0 0.0
    %1251 = vmatprep.subr.mxu0 0.0
    %1252 = vmatpush1.msra.mxu0 0.0
    %1253 = vmatprep.subr.mxu0 0.0
    %1254 = vmatpush1.msra.mxu0 0.0
    %1255 = vmatprep.subr.mxu0 0.0
    %1256 = vmatpush1.msra.mxu0 0.0
    %1257 = vmatprep.subr.mxu0 0.0
    %1258 = vmatpush1.msra.mxu0 %v285
    %1259 = vmatprep.subr.mxu0 0.0
    %1260 = vmatpush1.msra.mxu0 %v284
    %1261 = vmatprep.subr.mxu0 0.0
    %1262 = vmatpush1.msra.mxu0 %v283
    %1263 = vmatprep.subr.mxu0 0.0
    %1264 = vmatpush1.msra.mxu0 %v282
    %1265 = vmatprep.subr.mxu0 0.0
    %1266 = vmatpush2.msra.mxu0 0.0
    %1267 = vmatprep.subr.mxu0 0.0
    %1268 = vmatpush2.msra.mxu0 0.0
    %1269 = vmatprep.subr.mxu0 0.0
    %1270 = vmatpush2.msra.mxu0 0.0
    %1271 = vmatprep.subr.mxu0 0.0
    %1272 = vmatpush2.msra.mxu0 0.0
    %1273 = vmatprep.subr.mxu0 0.0
    %1274 = vmatpush2.msra.mxu0 0.0
    %1275 = vmatprep.subr.mxu0 0.0
    %1276 = vmatpush2.msra.mxu0 0.0
    %1277 = vmatprep.subr.mxu0 0.0
    %1278 = vmatpush2.msra.mxu0 0.0
    %1279 = vmatprep.subr.mxu0 0.0
    %1280 = vmatpush2.msra.mxu0 0.0
    %1281 = vmatprep.subr.mxu0 0.0
    %1282 = vmatpush2.msra.mxu0 0.0
    %1283 = vmatprep.subr.mxu0 0.0
    %1284 = vmatpush2.msra.mxu0 0.0
    %1285 = vmatprep.subr.mxu0 0.0
    %1286 = vmatpush2.msra.mxu0 0.0
    %1287 = vmatprep.subr.mxu0 0.0
    %1288 = vmatpush2.msra.mxu0 0.0
    %1289 = vmatprep.subr.mxu0 0.0
    %1290 = vmatpush2.msra.mxu0 0.0
    %1291 = vmatprep.subr.mxu0 0.0
    %1292 = vmatpush2.msra.mxu0 0.0
    %1293 = vmatprep.subr.mxu0 0.0
    %1294 = vmatpush2.msra.mxu0 0.0
    %1295 = vmatprep.subr.mxu0 0.0
    %1296 = vmatpush2.msra.mxu0 0.0
    %1297 = vmatprep.mubr.f32.mxu0 0.0
    %1298 = vmatmul.mubr.f32.gmra.mxu0 %v1231
    %v1299 = vpop.f32.mrf.mxu0
    %v1300 = vadd.f32 0.0, %v1299
    %v1301 = vpop.f32.mrf.mxu0
    %1302 = vdwg.mxu0
    %v1303 = vadd.f32 %v1228, %v1300
    %v1304 = vxor.u32 %v1303, 2147483648
    %v1305 = vmul.f32 %v1304, 1.442695
    %v1306 = vpow.pop %v1305
    %v1307 = vadd.f32 %v1306, 1.0
    %v1308 = vrcp.pop %v1307
    %v1309 = vmul.f32 1.0, %v1308
    %v1310 = vtanh.pop %v1303
    %v1311 = vmul.f32 %v1309, %v1112
    %1313 = vrot.lane.b32.xlu0 %v1310, 64
    %v1314 = vpop.permute.xlu0 %1313
    %v1316 = vmul.f32 %v1309, %v1314
    %1318 = vrot.lane.b32.xlu0 %v1316, 32
    %v1319 = vpop.permute.xlu0 %1318
    %v1321 = vadd.f32 %v1311, %v1319
    %v1322 = vtanh.pop %v1321
    %1324 = vrot.lane.b32.xlu0 %v1322, 64
    %v1325 = vpop.permute.xlu0 %1324
    %v1327 = vmul.f32 %v1309, %v1325
    %1329 = vrot.lane.b32.xlu0 %v1327, 64
    %v1330 = vpop.permute.xlu0 %1329
    %1332 = vst.msk [vmem:[%s1017] sm:$0x3] %vm493, %v1330
    %v1333 = vld [vmem:[#allocation2 + $0xa] sm:$0x3]
    %v1334 = vsel %vm287, %v1225, 0
    %1336 = vmatprep.subr.mxu0 0.0
    %1337 = vmatpush1.msra.mxu0 0.0
    %1338 = vmatprep.subr.mxu0 0.0
    %1339 = vmatpush1.msra.mxu0 0.0
    %1340 = vmatprep.subr.mxu0 0.0
    %1341 = vmatpush1.msra.mxu0 0.0
    %1342 = vmatprep.subr.mxu0 0.0
    %1343 = vmatpush1.msra.mxu0 0.0
    %1344 = vmatprep.subr.mxu0 0.0
    %1345 = vmatpush1.msra.mxu0 0.0
    %1346 = vmatprep.subr.mxu0 0.0
    %1347 = vmatpush1.msra.mxu0 0.0
    %1348 = vmatprep.subr.mxu0 0.0
    %1349 = vmatpush1.msra.mxu0 0.0
    %1350 = vmatprep.subr.mxu0 0.0
    %1351 = vmatpush1.msra.mxu0 0.0
    %1352 = vmatprep.subr.mxu0 0.0
    %1353 = vmatpush1.msra.mxu0 0.0
    %1354 = vmatprep.subr.mxu0 0.0
    %1355 = vmatpush1.msra.mxu0 0.0
    %1356 = vmatprep.subr.mxu0 0.0
    %1357 = vmatpush1.msra.mxu0 0.0
    %1358 = vmatprep.subr.mxu0 0.0
    %1359 = vmatpush1.msra.mxu0 0.0
    %1360 = vmatprep.subr.mxu0 0.0
    %1361 = vmatpush1.msra.mxu0 %v281
    %1362 = vmatprep.subr.mxu0 0.0
    %1363 = vmatpush1.msra.mxu0 %v280
    %1364 = vmatprep.subr.mxu0 0.0
    %1365 = vmatpush1.msra.mxu0 %v279
    %1366 = vmatprep.subr.mxu0 0.0
    %1367 = vmatpush1.msra.mxu0 %v278
    %1368 = vmatprep.subr.mxu0 0.0
    %1369 = vmatpush2.msra.mxu0 0.0
    %1370 = vmatprep.subr.mxu0 0.0
    %1371 = vmatpush2.msra.mxu0 0.0
    %1372 = vmatprep.subr.mxu0 0.0
    %1373 = vmatpush2.msra.mxu0 0.0
    %1374 = vmatprep.subr.mxu0 0.0
    %1375 = vmatpush2.msra.mxu0 0.0
    %1376 = vmatprep.subr.mxu0 0.0
    %1377 = vmatpush2.msra.mxu0 0.0
    %1378 = vmatprep.subr.mxu0 0.0
    %1379 = vmatpush2.msra.mxu0 0.0
    %1380 = vmatprep.subr.mxu0 0.0
    %1381 = vmatpush2.msra.mxu0 0.0
    %1382 = vmatprep.subr.mxu0 0.0
    %1383 = vmatpush2.msra.mxu0 0.0
    %1384 = vmatprep.subr.mxu0 0.0
    %1385 = vmatpush2.msra.mxu0 0.0
    %1386 = vmatprep.subr.mxu0 0.0
    %1387 = vmatpush2.msra.mxu0 0.0
    %1388 = vmatprep.subr.mxu0 0.0
    %1389 = vmatpush2.msra.mxu0 0.0
    %1390 = vmatprep.subr.mxu0 0.0
    %1391 = vmatpush2.msra.mxu0 0.0
    %1392 = vmatprep.subr.mxu0 0.0
    %1393 = vmatpush2.msra.mxu0 0.0
    %1394 = vmatprep.subr.mxu0 0.0
    %1395 = vmatpush2.msra.mxu0 0.0
    %1396 = vmatprep.subr.mxu0 0.0
    %1397 = vmatpush2.msra.mxu0 0.0
    %1398 = vmatprep.subr.mxu0 0.0
    %1399 = vmatpush2.msra.mxu0 0.0
    %1400 = vmatprep.mubr.f32.mxu0 0.0
    %1401 = vmatmul.mubr.f32.gmra.mxu0 %v1334
    %v1402 = vpop.f32.mrf.mxu0
    %v1403 = vadd.f32 0.0, %v1402
    %v1404 = vpop.f32.mrf.mxu0
    %1405 = vdwg.mxu0
    %v1406 = vadd.f32 %v1333, %v1403
    %v1407 = vxor.u32 %v1406, 2147483648
    %v1408 = vmul.f32 %v1407, 1.442695
    %v1409 = vpow.pop %v1408
    %v1410 = vadd.f32 %v1409, 1.0
    %v1411 = vrcp.pop %v1410
    %v1412 = vmul.f32 1.0, %v1411
    %v1413 = vtanh.pop %v1406
    %v1414 = vmul.f32 %v1412, %v1216
    %1416 = vrot.lane.b32.xlu0 %v1413, 64
    %v1417 = vpop.permute.xlu0 %1416
    %v1419 = vmul.f32 %v1412, %v1417
    %1421 = vrot.lane.b32.xlu0 %v1419, 32
    %v1422 = vpop.permute.xlu0 %1421
    %v1424 = vadd.f32 %v1414, %v1422
    %v1425 = vtanh.pop %v1424
    %1427 = vrot.lane.b32.xlu0 %v1425, 64
    %v1428 = vpop.permute.xlu0 %1427
    %v1430 = vmul.f32 %v1412, %v1428
    %1432 = vrot.lane.b32.xlu0 %v1430, 32
    %v1433 = vpop.permute.xlu0 %1432
    %1435 = vst.msk [vmem:[%s913] sm:$0x3] %vm390, %v1433
    %v1436 = vld [vmem:[#allocation3 + $0x4] sm:$0x3]
    %1437 = vrot.lane.b32.xlu0 %v1327, 32
    %v1438 = vpop.permute.xlu0 %1437
    %v1439 = vsel %vm287, %v1438, 0
    %1441 = vmatprep.subr.mxu0 0.0
    %1442 = vmatpush1.msra.mxu0 0.0
    %1443 = vmatprep.subr.mxu0 0.0
    %1444 = vmatpush1.msra.mxu0 0.0
    %1445 = vmatprep.subr.mxu0 0.0
    %1446 = vmatpush1.msra.mxu0 0.0
    %1447 = vmatprep.subr.mxu0 0.0
    %1448 = vmatpush1.msra.mxu0 0.0
    %1449 = vmatprep.subr.mxu0 0.0
    %1450 = vmatpush1.msra.mxu0 0.0
    %1451 = vmatprep.subr.mxu0 0.0
    %1452 = vmatpush1.msra.mxu0 0.0
    %1453 = vmatprep.subr.mxu0 0.0
    %1454 = vmatpush1.msra.mxu0 0.0
    %1455 = vmatprep.subr.mxu0 0.0
    %1456 = vmatpush1.msra.mxu0 0.0
    %1457 = vmatprep.subr.mxu0 0.0
    %1458 = vmatpush1.msra.mxu0 0.0
    %1459 = vmatprep.subr.mxu0 0.0
    %1460 = vmatpush1.msra.mxu0 0.0
    %1461 = vmatprep.subr.mxu0 0.0
    %1462 = vmatpush1.msra.mxu0 0.0
    %1463 = vmatprep.subr.mxu0 0.0
    %1464 = vmatpush1.msra.mxu0 0.0
    %1465 = vmatprep.subr.mxu0 0.0
    %1466 = vmatpush1.msra.mxu0 %v285
    %1467 = vmatprep.subr.mxu0 0.0
    %1468 = vmatpush1.msra.mxu0 %v284
    %1469 = vmatprep.subr.mxu0 0.0
    %1470 = vmatpush1.msra.mxu0 %v283
    %1471 = vmatprep.subr.mxu0 0.0
    %1472 = vmatpush1.msra.mxu0 %v282
    %1473 = vmatprep.subr.mxu0 0.0
    %1474 = vmatpush2.msra.mxu0 0.0
    %1475 = vmatprep.subr.mxu0 0.0
    %1476 = vmatpush2.msra.mxu0 0.0
    %1477 = vmatprep.subr.mxu0 0.0
    %1478 = vmatpush2.msra.mxu0 0.0
    %1479 = vmatprep.subr.mxu0 0.0
    %1480 = vmatpush2.msra.mxu0 0.0
    %1481 = vmatprep.subr.mxu0 0.0
    %1482 = vmatpush2.msra.mxu0 0.0
    %1483 = vmatprep.subr.mxu0 0.0
    %1484 = vmatpush2.msra.mxu0 0.0
    %1485 = vmatprep.subr.mxu0 0.0
    %1486 = vmatpush2.msra.mxu0 0.0
    %1487 = vmatprep.subr.mxu0 0.0
    %1488 = vmatpush2.msra.mxu0 0.0
    %1489 = vmatprep.subr.mxu0 0.0
    %1490 = vmatpush2.msra.mxu0 0.0
    %1491 = vmatprep.subr.mxu0 0.0
    %1492 = vmatpush2.msra.mxu0 0.0
    %1493 = vmatprep.subr.mxu0 0.0
    %1494 = vmatpush2.msra.mxu0 0.0
    %1495 = vmatprep.subr.mxu0 0.0
    %1496 = vmatpush2.msra.mxu0 0.0
    %1497 = vmatprep.subr.mxu0 0.0
    %1498 = vmatpush2.msra.mxu0 0.0
    %1499 = vmatprep.subr.mxu0 0.0
    %1500 = vmatpush2.msra.mxu0 0.0
    %1501 = vmatprep.subr.mxu0 0.0
    %1502 = vmatpush2.msra.mxu0 0.0
    %1503 = vmatprep.subr.mxu0 0.0
    %1504 = vmatpush2.msra.mxu0 0.0
    %1505 = vmatprep.mubr.f32.mxu0 0.0
    %1506 = vmatmul.mubr.f32.gmra.mxu0 %v1439
    %v1507 = vpop.f32.mrf.mxu0
    %v1508 = vadd.f32 0.0, %v1507
    %v1509 = vpop.f32.mrf.mxu0
    %1510 = vdwg.mxu0
    %v1511 = vadd.f32 %v1436, %v1508
    %v1512 = vxor.u32 %v1511, 2147483648
    %v1513 = vmul.f32 %v1512, 1.442695
    %v1514 = vpow.pop %v1513
    %v1515 = vadd.f32 %v1514, 1.0
    %v1516 = vrcp.pop %v1515
    %v1517 = vmul.f32 1.0, %v1516
    %v1518 = vtanh.pop %v1511
    %v1519 = vmul.f32 %v1517, %v1321
    %1521 = vrot.lane.b32.xlu0 %v1518, 64
    %v1522 = vpop.permute.xlu0 %1521
    %v1524 = vmul.f32 %v1517, %v1522
    %1526 = vrot.lane.b32.xlu0 %v1524, 32
    %v1527 = vpop.permute.xlu0 %1526
    %v1529 = vadd.f32 %v1519, %v1527
    %v1530 = vtanh.pop %v1529
    %1532 = vrot.lane.b32.xlu0 %v1530, 64
    %v1533 = vpop.permute.xlu0 %1532
    %v1535 = vmul.f32 %v1517, %v1533
    %1537 = vrot.lane.b32.xlu0 %v1535, 64
    %v1538 = vpop.permute.xlu0 %1537
    %1540 = vst.msk [vmem:[%s807] sm:$0x3] %vm493, %v1538
    %v1541 = vld [vmem:[#allocation2 + $0xc] sm:$0x3]
    %v1542 = vsel %vm287, %v1433, 0
    %1544 = vmatprep.subr.mxu0 0.0
    %1545 = vmatpush1.msra.mxu0 0.0
    %1546 = vmatprep.subr.mxu0 0.0
    %1547 = vmatpush1.msra.mxu0 0.0
    %1548 = vmatprep.subr.mxu0 0.0
    %1549 = vmatpush1.msra.mxu0 0.0
    %1550 = vmatprep.subr.mxu0 0.0
    %1551 = vmatpush1.msra.mxu0 0.0
    %1552 = vmatprep.subr.mxu0 0.0
    %1553 = vmatpush1.msra.mxu0 0.0
    %1554 = vmatprep.subr.mxu0 0.0
    %1555 = vmatpush1.msra.mxu0 0.0
    %1556 = vmatprep.subr.mxu0 0.0
    %1557 = vmatpush1.msra.mxu0 0.0
    %1558 = vmatprep.subr.mxu0 0.0
    %1559 = vmatpush1.msra.mxu0 0.0
    %1560 = vmatprep.subr.mxu0 0.0
    %1561 = vmatpush1.msra.mxu0 0.0
    %1562 = vmatprep.subr.mxu0 0.0
    %1563 = vmatpush1.msra.mxu0 0.0
    %1564 = vmatprep.subr.mxu0 0.0
    %1565 = vmatpush1.msra.mxu0 0.0
    %1566 = vmatprep.subr.mxu0 0.0
    %1567 = vmatpush1.msra.mxu0 0.0
    %1568 = vmatprep.subr.mxu0 0.0
    %1569 = vmatpush1.msra.mxu0 %v281
    %1570 = vmatprep.subr.mxu0 0.0
    %1571 = vmatpush1.msra.mxu0 %v280
    %1572 = vmatprep.subr.mxu0 0.0
    %1573 = vmatpush1.msra.mxu0 %v279
    %1574 = vmatprep.subr.mxu0 0.0
    %1575 = vmatpush1.msra.mxu0 %v278
    %1576 = vmatprep.subr.mxu0 0.0
    %1577 = vmatpush2.msra.mxu0 0.0
    %1578 = vmatprep.subr.mxu0 0.0
    %1579 = vmatpush2.msra.mxu0 0.0
    %1580 = vmatprep.subr.mxu0 0.0
    %1581 = vmatpush2.msra.mxu0 0.0
    %1582 = vmatprep.subr.mxu0 0.0
    %1583 = vmatpush2.msra.mxu0 0.0
    %1584 = vmatprep.subr.mxu0 0.0
    %1585 = vmatpush2.msra.mxu0 0.0
    %1586 = vmatprep.subr.mxu0 0.0
    %1587 = vmatpush2.msra.mxu0 0.0
    %1588 = vmatprep.subr.mxu0 0.0
    %1589 = vmatpush2.msra.mxu0 0.0
    %1590 = vmatprep.subr.mxu0 0.0
    %1591 = vmatpush2.msra.mxu0 0.0
    %1592 = vmatprep.subr.mxu0 0.0
    %1593 = vmatpush2.msra.mxu0 0.0
    %1594 = vmatprep.subr.mxu0 0.0
    %1595 = vmatpush2.msra.mxu0 0.0
    %1596 = vmatprep.subr.mxu0 0.0
    %1597 = vmatpush2.msra.mxu0 0.0
    %1598 = vmatprep.subr.mxu0 0.0
    %1599 = vmatpush2.msra.mxu0 0.0
    %1600 = vmatprep.subr.mxu0 0.0
    %1601 = vmatpush2.msra.mxu0 0.0
    %1602 = vmatprep.subr.mxu0 0.0
    %1603 = vmatpush2.msra.mxu0 0.0
    %1604 = vmatprep.subr.mxu0 0.0
    %1605 = vmatpush2.msra.mxu0 0.0
    %1606 = vmatprep.subr.mxu0 0.0
    %1607 = vmatpush2.msra.mxu0 0.0
    %1608 = vmatprep.mubr.f32.mxu0 0.0
    %1609 = vmatmul.mubr.f32.gmra.mxu0 %v1542
    %v1610 = vpop.f32.mrf.mxu0
    %v1611 = vadd.f32 0.0, %v1610
    %v1612 = vpop.f32.mrf.mxu0
    %1613 = vdwg.mxu0
    %v1614 = vadd.f32 %v1541, %v1611
    %v1615 = vxor.u32 %v1614, 2147483648
    %v1616 = vmul.f32 %v1615, 1.442695
    %v1617 = vpow.pop %v1616
    %v1618 = vadd.f32 %v1617, 1.0
    %v1619 = vrcp.pop %v1618
    %v1620 = vmul.f32 1.0, %v1619
    %v1621 = vtanh.pop %v1614
    %v1622 = vmul.f32 %v1620, %v1424
    %1624 = vrot.lane.b32.xlu0 %v1621, 64
    %v1625 = vpop.permute.xlu0 %1624
    %v1627 = vmul.f32 %v1620, %v1625
    %1629 = vrot.lane.b32.xlu0 %v1627, 32
    %v1630 = vpop.permute.xlu0 %1629
    %v1632 = vadd.f32 %v1622, %v1630
    %v1633 = vtanh.pop %v1632
    %1635 = vrot.lane.b32.xlu0 %v1633, 64
    %v1636 = vpop.permute.xlu0 %1635
    %v1638 = vmul.f32 %v1620, %v1636
    %1640 = vrot.lane.b32.xlu0 %v1638, 32
    %v1641 = vpop.permute.xlu0 %1640
    %1643 = vst.msk [vmem:[%s703] sm:$0x3] %vm390, %v1641
    %v1644 = vld [vmem:[#allocation3 + $0x2] sm:$0x3]
    %1645 = vrot.lane.b32.xlu0 %v1535, 32
    %v1646 = vpop.permute.xlu0 %1645
    %v1647 = vsel %vm287, %v1646, 0
    %1649 = vmatprep.subr.mxu0 0.0
    %1650 = vmatpush1.msra.mxu0 0.0
    %1651 = vmatprep.subr.mxu0 0.0
    %1652 = vmatpush1.msra.mxu0 0.0
    %1653 = vmatprep.subr.mxu0 0.0
    %1654 = vmatpush1.msra.mxu0 0.0
    %1655 = vmatprep.subr.mxu0 0.0
    %1656 = vmatpush1.msra.mxu0 0.0
    %1657 = vmatprep.subr.mxu0 0.0
    %1658 = vmatpush1.msra.mxu0 0.0
    %1659 = vmatprep.subr.mxu0 0.0
    %1660 = vmatpush1.msra.mxu0 0.0
    %1661 = vmatprep.subr.mxu0 0.0
    %1662 = vmatpush1.msra.mxu0 0.0
    %1663 = vmatprep.subr.mxu0 0.0
    %1664 = vmatpush1.msra.mxu0 0.0
    %1665 = vmatprep.subr.mxu0 0.0
    %1666 = vmatpush1.msra.mxu0 0.0
    %1667 = vmatprep.subr.mxu0 0.0
    %1668 = vmatpush1.msra.mxu0 0.0
    %1669 = vmatprep.subr.mxu0 0.0
    %1670 = vmatpush1.msra.mxu0 0.0
    %1671 = vmatprep.subr.mxu0 0.0
    %1672 = vmatpush1.msra.mxu0 0.0
    %1673 = vmatprep.subr.mxu0 0.0
    %1674 = vmatpush1.msra.mxu0 %v285
    %1675 = vmatprep.subr.mxu0 0.0
    %1676 = vmatpush1.msra.mxu0 %v284
    %1677 = vmatprep.subr.mxu0 0.0
    %1678 = vmatpush1.msra.mxu0 %v283
    %1679 = vmatprep.subr.mxu0 0.0
    %1680 = vmatpush1.msra.mxu0 %v282
    %1681 = vmatprep.subr.mxu0 0.0
    %1682 = vmatpush2.msra.mxu0 0.0
    %1683 = vmatprep.subr.mxu0 0.0
    %1684 = vmatpush2.msra.mxu0 0.0
    %1685 = vmatprep.subr.mxu0 0.0
    %1686 = vmatpush2.msra.mxu0 0.0
    %1687 = vmatprep.subr.mxu0 0.0
    %1688 = vmatpush2.msra.mxu0 0.0
    %1689 = vmatprep.subr.mxu0 0.0
    %1690 = vmatpush2.msra.mxu0 0.0
    %1691 = vmatprep.subr.mxu0 0.0
    %1692 = vmatpush2.msra.mxu0 0.0
    %1693 = vmatprep.subr.mxu0 0.0
    %1694 = vmatpush2.msra.mxu0 0.0
    %1695 = vmatprep.subr.mxu0 0.0
    %1696 = vmatpush2.msra.mxu0 0.0
    %1697 = vmatprep.subr.mxu0 0.0
    %1698 = vmatpush2.msra.mxu0 0.0
    %1699 = vmatprep.subr.mxu0 0.0
    %1700 = vmatpush2.msra.mxu0 0.0
    %1701 = vmatprep.subr.mxu0 0.0
    %1702 = vmatpush2.msra.mxu0 0.0
    %1703 = vmatprep.subr.mxu0 0.0
    %1704 = vmatpush2.msra.mxu0 0.0
    %1705 = vmatprep.subr.mxu0 0.0
    %1706 = vmatpush2.msra.mxu0 0.0
    %1707 = vmatprep.subr.mxu0 0.0
    %1708 = vmatpush2.msra.mxu0 0.0
    %1709 = vmatprep.subr.mxu0 0.0
    %1710 = vmatpush2.msra.mxu0 0.0
    %1711 = vmatprep.subr.mxu0 0.0
    %1712 = vmatpush2.msra.mxu0 0.0
    %1713 = vmatprep.mubr.f32.mxu0 0.0
    %1714 = vmatmul.mubr.f32.gmra.mxu0 %v1647
    %v1715 = vpop.f32.mrf.mxu0
    %v1716 = vadd.f32 0.0, %v1715
    %v1717 = vpop.f32.mrf.mxu0
    %1718 = vdwg.mxu0
    %v1719 = vadd.f32 %v1644, %v1716
    %v1720 = vxor.u32 %v1719, 2147483648
    %v1721 = vmul.f32 %v1720, 1.442695
    %v1722 = vpow.pop %v1721
    %v1723 = vadd.f32 %v1722, 1.0
    %v1724 = vrcp.pop %v1723
    %v1725 = vmul.f32 1.0, %v1724
    %v1726 = vtanh.pop %v1719
    %v1727 = vmul.f32 %v1725, %v1529
    %1729 = vrot.lane.b32.xlu0 %v1726, 64
    %v1730 = vpop.permute.xlu0 %1729
    %v1732 = vmul.f32 %v1725, %v1730
    %1734 = vrot.lane.b32.xlu0 %v1732, 32
    %v1735 = vpop.permute.xlu0 %1734
    %v1737 = vadd.f32 %v1727, %v1735
    %v1738 = vtanh.pop %v1737
    %1740 = vrot.lane.b32.xlu0 %v1738, 64
    %v1741 = vpop.permute.xlu0 %1740
    %v1743 = vmul.f32 %v1725, %v1741
    %1745 = vrot.lane.b32.xlu0 %v1743, 64
    %v1746 = vpop.permute.xlu0 %1745
    %1748 = vst.msk [vmem:[%s597] sm:$0x3] %vm493, %v1746
    %v1749 = vld [vmem:[#allocation2 + $0xe] sm:$0x3]
    %v1750 = vsel %vm287, %v1641, 0
    %1752 = vmatprep.subr.mxu0 0.0
    %1753 = vmatpush1.msra.mxu0 0.0
    %1754 = vmatprep.subr.mxu0 0.0
    %1755 = vmatpush1.msra.mxu0 0.0
    %1756 = vmatprep.subr.mxu0 0.0
    %1757 = vmatpush1.msra.mxu0 0.0
    %1758 = vmatprep.subr.mxu0 0.0
    %1759 = vmatpush1.msra.mxu0 0.0
    %1760 = vmatprep.subr.mxu0 0.0
    %1761 = vmatpush1.msra.mxu0 0.0
    %1762 = vmatprep.subr.mxu0 0.0
    %1763 = vmatpush1.msra.mxu0 0.0
    %1764 = vmatprep.subr.mxu0 0.0
    %1765 = vmatpush1.msra.mxu0 0.0
    %1766 = vmatprep.subr.mxu0 0.0
    %1767 = vmatpush1.msra.mxu0 0.0
    %1768 = vmatprep.subr.mxu0 0.0
    %1769 = vmatpush1.msra.mxu0 0.0
    %1770 = vmatprep.subr.mxu0 0.0
    %1771 = vmatpush1.msra.mxu0 0.0
    %1772 = vmatprep.subr.mxu0 0.0
    %1773 = vmatpush1.msra.mxu0 0.0
    %1774 = vmatprep.subr.mxu0 0.0
    %1775 = vmatpush1.msra.mxu0 0.0
    %1776 = vmatprep.subr.mxu0 0.0
    %1777 = vmatpush1.msra.mxu0 %v281
    %1778 = vmatprep.subr.mxu0 0.0
    %1779 = vmatpush1.msra.mxu0 %v280
    %1780 = vmatprep.subr.mxu0 0.0
    %1781 = vmatpush1.msra.mxu0 %v279
    %1782 = vmatprep.subr.mxu0 0.0
    %1783 = vmatpush1.msra.mxu0 %v278
    %1784 = vmatprep.subr.mxu0 0.0
    %1785 = vmatpush2.msra.mxu0 0.0
    %1786 = vmatprep.subr.mxu0 0.0
    %1787 = vmatpush2.msra.mxu0 0.0
    %1788 = vmatprep.subr.mxu0 0.0
    %1789 = vmatpush2.msra.mxu0 0.0
    %1790 = vmatprep.subr.mxu0 0.0
    %1791 = vmatpush2.msra.mxu0 0.0
    %1792 = vmatprep.subr.mxu0 0.0
    %1793 = vmatpush2.msra.mxu0 0.0
    %1794 = vmatprep.subr.mxu0 0.0
    %1795 = vmatpush2.msra.mxu0 0.0
    %1796 = vmatprep.subr.mxu0 0.0
    %1797 = vmatpush2.msra.mxu0 0.0
    %1798 = vmatprep.subr.mxu0 0.0
    %1799 = vmatpush2.msra.mxu0 0.0
    %1800 = vmatprep.subr.mxu0 0.0
    %1801 = vmatpush2.msra.mxu0 0.0
    %1802 = vmatprep.subr.mxu0 0.0
    %1803 = vmatpush2.msra.mxu0 0.0
    %1804 = vmatprep.subr.mxu0 0.0
    %1805 = vmatpush2.msra.mxu0 0.0
    %1806 = vmatprep.subr.mxu0 0.0
    %1807 = vmatpush2.msra.mxu0 0.0
    %1808 = vmatprep.subr.mxu0 0.0
    %1809 = vmatpush2.msra.mxu0 0.0
    %1810 = vmatprep.subr.mxu0 0.0
    %1811 = vmatpush2.msra.mxu0 0.0
    %1812 = vmatprep.subr.mxu0 0.0
    %1813 = vmatpush2.msra.mxu0 0.0
    %1814 = vmatprep.subr.mxu0 0.0
    %1815 = vmatpush2.msra.mxu0 0.0
    %1816 = vmatprep.mubr.f32.mxu0 0.0
    %1817 = vmatmul.mubr.f32.gmra.mxu0 %v1750
    %v1818 = vpop.f32.mrf.mxu0
    %v1819 = vadd.f32 0.0, %v1818
    %v1820 = vpop.f32.mrf.mxu0
    %1821 = vdwg.mxu0
    %v1822 = vadd.f32 %v1749, %v1819
    %v1823 = vxor.u32 %v1822, 2147483648
    %v1824 = vmul.f32 %v1823, 1.442695
    %v1825 = vpow.pop %v1824
    %v1826 = vadd.f32 %v1825, 1.0
    %v1827 = vrcp.pop %v1826
    %v1828 = vmul.f32 1.0, %v1827
    %v1829 = vtanh.pop %v1822
    %v1830 = vmul.f32 %v1828, %v1632
    %1832 = vrot.lane.b32.xlu0 %v1829, 64
    %v1833 = vpop.permute.xlu0 %1832
    %v1835 = vmul.f32 %v1828, %v1833
    %1837 = vrot.lane.b32.xlu0 %v1835, 32
    %v1838 = vpop.permute.xlu0 %1837
    %v1840 = vadd.f32 %v1830, %v1838
    %v1841 = vtanh.pop %v1840
    %1843 = vrot.lane.b32.xlu0 %v1841, 64
    %v1844 = vpop.permute.xlu0 %1843
    %v1846 = vmul.f32 %v1828, %v1844
    %1848 = vrot.lane.b32.xlu0 %v1846, 32
    %v1849 = vpop.permute.xlu0 %1848
    %1851 = vst.msk [vmem:[%s492] sm:$0x3] %vm390, %v1849
    %v1852 = vld [vmem:[#allocation3] sm:$0x3]
    %1853 = vrot.lane.b32.xlu0 %v1743, 32
    %v1854 = vpop.permute.xlu0 %1853
    %v1855 = vsel %vm287, %v1854, 0
    %1857 = vmatprep.subr.mxu0 0.0
    %1858 = vmatpush1.msra.mxu0 0.0
    %1859 = vmatprep.subr.mxu0 0.0
    %1860 = vmatpush1.msra.mxu0 0.0
    %1861 = vmatprep.subr.mxu0 0.0
    %1862 = vmatpush1.msra.mxu0 0.0
    %1863 = vmatprep.subr.mxu0 0.0
    %1864 = vmatpush1.msra.mxu0 0.0
    %1865 = vmatprep.subr.mxu0 0.0
    %1866 = vmatpush1.msra.mxu0 0.0
    %1867 = vmatprep.subr.mxu0 0.0
    %1868 = vmatpush1.msra.mxu0 0.0
    %1869 = vmatprep.subr.mxu0 0.0
    %1870 = vmatpush1.msra.mxu0 0.0
    %1871 = vmatprep.subr.mxu0 0.0
    %1872 = vmatpush1.msra.mxu0 0.0
    %1873 = vmatprep.subr.mxu0 0.0
    %1874 = vmatpush1.msra.mxu0 0.0
    %1875 = vmatprep.subr.mxu0 0.0
    %1876 = vmatpush1.msra.mxu0 0.0
    %1877 = vmatprep.subr.mxu0 0.0
    %1878 = vmatpush1.msra.mxu0 0.0
    %1879 = vmatprep.subr.mxu0 0.0
    %1880 = vmatpush1.msra.mxu0 0.0
    %1881 = vmatprep.subr.mxu0 0.0
    %1882 = vmatpush1.msra.mxu0 %v285
    %1883 = vmatprep.subr.mxu0 0.0
    %1884 = vmatpush1.msra.mxu0 %v284
    %1885 = vmatprep.subr.mxu0 0.0
    %1886 = vmatpush1.msra.mxu0 %v283
    %1887 = vmatprep.subr.mxu0 0.0
    %1888 = vmatpush1.msra.mxu0 %v282
    %1889 = vmatprep.subr.mxu0 0.0
    %1890 = vmatpush2.msra.mxu0 0.0
    %1891 = vmatprep.subr.mxu0 0.0
    %1892 = vmatpush2.msra.mxu0 0.0
    %1893 = vmatprep.subr.mxu0 0.0
    %1894 = vmatpush2.msra.mxu0 0.0
    %1895 = vmatprep.subr.mxu0 0.0
    %1896 = vmatpush2.msra.mxu0 0.0
    %1897 = vmatprep.subr.mxu0 0.0
    %1898 = vmatpush2.msra.mxu0 0.0
    %1899 = vmatprep.subr.mxu0 0.0
    %1900 = vmatpush2.msra.mxu0 0.0
    %1901 = vmatprep.subr.mxu0 0.0
    %1902 = vmatpush2.msra.mxu0 0.0
    %1903 = vmatprep.subr.mxu0 0.0
    %1904 = vmatpush2.msra.mxu0 0.0
    %1905 = vmatprep.subr.mxu0 0.0
    %1906 = vmatpush2.msra.mxu0 0.0
    %1907 = vmatprep.subr.mxu0 0.0
    %1908 = vmatpush2.msra.mxu0 0.0
    %1909 = vmatprep.subr.mxu0 0.0
    %1910 = vmatpush2.msra.mxu0 0.0
    %1911 = vmatprep.subr.mxu0 0.0
    %1912 = vmatpush2.msra.mxu0 0.0
    %1913 = vmatprep.subr.mxu0 0.0
    %1914 = vmatpush2.msra.mxu0 0.0
    %1915 = vmatprep.subr.mxu0 0.0
    %1916 = vmatpush2.msra.mxu0 0.0
    %1917 = vmatprep.subr.mxu0 0.0
    %1918 = vmatpush2.msra.mxu0 0.0
    %1919 = vmatprep.subr.mxu0 0.0
    %1920 = vmatpush2.msra.mxu0 0.0
    %1921 = vmatprep.mubr.f32.mxu0 0.0
    %1922 = vmatmul.mubr.f32.gmra.mxu0 %v1855
    %v1923 = vpop.f32.mrf.mxu0
    %v1924 = vadd.f32 0.0, %v1923
    %v1925 = vpop.f32.mrf.mxu0
    %1926 = vdwg.mxu0
    %v1927 = vadd.f32 %v1852, %v1924
    %v1928 = vxor.u32 %v1927, 2147483648
    %v1929 = vmul.f32 %v1928, 1.442695
    %v1930 = vpow.pop %v1929
    %v1931 = vadd.f32 %v1930, 1.0
    %v1932 = vrcp.pop %v1931
    %v1933 = vmul.f32 1.0, %v1932
    %v1934 = vtanh.pop %v1927
    %v1935 = vmul.f32 %v1933, %v1737
    %1937 = vrot.lane.b32.xlu0 %v1934, 64
    %v1938 = vpop.permute.xlu0 %1937
    %v1940 = vmul.f32 %v1933, %v1938
    %1942 = vrot.lane.b32.xlu0 %v1940, 32
    %v1943 = vpop.permute.xlu0 %1942
    %v1945 = vadd.f32 %v1935, %v1943
    %v1946 = vtanh.pop %v1945
    %1948 = vrot.lane.b32.xlu0 %v1946, 64
    %v1949 = vpop.permute.xlu0 %1948
    %v1951 = vmul.f32 %v1933, %v1949
    %1953 = vrot.lane.b32.xlu0 %v1951, 64
    %v1954 = vpop.permute.xlu0 %1953
    %1956 = vst.msk [vmem:[#allocation13] sm:$0x3] %vm493, %v1954
    // Predicated region
    $region50: #{tpu_custom_call.1} parent=1 // pred_check
      _
    $region51: #{tpu_custom_call.1} parent=1 // pred_check_branch
      %1958 = sbr.rel (0) target = $region53
    $region52: #{tpu_custom_call.1} parent=1 // pred_region
      %s1960 = ssub.s32 256, 256
      %1961 = vsyncadd [#allocation6], %s1960
      %s1962 = sshll.u32 [#allocation13], 4
      %s1963 = int_to_ptr.vmem [resolvable:$true] %s1962
      %1968 = dma.vmem_to_hbm [thread:$0]  %s1963, 256, %s7, [#allocation6], 32, 32, 2
    $region53: #{tpu_custom_call.1} parent=1 // pred_fallthru
      _
    // Predicated region
    $region54: #{tpu_custom_call.1} parent=1 // pred_check
      _
    $region55: #{tpu_custom_call.1} parent=1 // pred_check_branch
      %1970 = sbr.rel (0) target = $region57
    $region56: #{tpu_custom_call.1} parent=1 // pred_region
      %1971 = dma.done [#allocation6], 256
    $region57: #{tpu_custom_call.1} parent=1 // pred_fallthru
      _
    %1972 = vsyncpa [#allocation5], 1
    %1973 = vsyncpa [#allocation8], 1
    %1974 = vsyncpa [#allocation11], 1
    %1975 = vsyncpa [#allocation6], 1

</llo_original>
